<compile_context>
chip_gen: v7x
topology: tpu7x:2x2x1
jax: 0.10.0
libtpu: 0.0.40
codegen_flags: <defaults>
</compile_context>

<pallas_src>
import jax
import jax.numpy as jnp
import numpy as np
from jax.experimental import pallas as pl
from jax.experimental.pallas import tpu as pltpu

N_CLASSES = 101   # SplinesModel.n_classes
NEG_INF = -1e30   # bias for padded class columns (exp -> 0, never the argmax)


def _splines_kernel(x_ref, w_ref, b_ref, knots_ref, out_ref):
    TB = x_ref.shape[0]
    C = out_ref.shape[1]          # padded, lane-dense class dim (128)
    NK = knots_ref.shape[1]

    x = x_ref[...]                # (TB, D) f32
    w = w_ref[...]                # (D, C)  f32 (zero in padded columns)
    b = b_ref[...]                # (1, C)  f32 (NEG_INF in padded columns)

    # --- self.model(input): linear head -> logits. Full f32 matmul (D is tiny,
    # extra MXU passes are free; avoids bf16-induced argmax/score flips). ---
    logits = jnp.dot(x, w, preferred_element_type=jnp.float32,
                     precision=jax.lax.Precision.HIGHEST) + b          # (TB, C)

    # --- torch.max(F.softmax(logits), dim=1) without materializing softmax ---
    # argmax(softmax) == argmax(logits); max(softmax) == 1/sum(exp(logits - m)).
    m = jnp.max(logits, axis=-1, keepdims=True)                        # (TB, 1)
    col = jax.lax.broadcasted_iota(jnp.int32, (TB, C), 1)              # (TB, C)
    pred = jnp.min(jnp.where(logits == m, col, C),
                   axis=-1, keepdims=True)                             # first argmax
    denom = jnp.sum(jnp.exp(logits - m), axis=-1, keepdims=True)       # (TB, 1)
    # Exact divide: kernel is HBM-bound, and the reference's exact-equality
    # branches (`sc == 1.0`) make the approx EUP reciprocal not worth the risk.
    s = 1.0 / denom                                                    # max softmax prob

    # --- self.splines(score): interpolated_function semantics ---
    knots = knots_ref[...]                                             # (4, NK) f32
    kx = knots[0:1, :]                                                 # sorted knot x
    ky = knots[1:2, :]
    ca = knots[2:3, :]                                                 # interp = ca[ind] + cb[ind]*s
    cb = knots[3:4, :]                                                 # (host-precomputed; keeps the
                                                                       #  original swapped-weight formula)

    # first index with kx[ind] >= s  == count(kx < s)  (first_above)
    ind = jnp.sum((kx < s).astype(jnp.int32), axis=-1, keepdims=True)
    ind = jnp.clip(ind, 1, NK - 1)                                     # only used in interior case
    kidx = jax.lax.broadcasted_iota(jnp.int32, (TB, NK), 1)
    oh = (kidx == ind).astype(jnp.float32)
    # single fused cross-lane reduce: A[ind] + B[ind]*s
    interp = jnp.sum(oh * (ca + cb * s), axis=-1, keepdims=True)

    x_first, x_last = kx[:, 0:1], kx[:, NK - 1:NK]
    y_first, y_last = ky[:, 0:1], ky[:, NK - 1:NK]
    sc = jnp.where(s >= x_last, y_last,
                   jnp.where(s <= x_first, y_first, interp))           # (TB, 1)

    # --- clamping rules from calibrate() ---
    sc = jnp.where(sc < 0.0, 1.0 / N_CLASSES, sc)
    sc = jnp.where(sc > 1.0, 1.0, sc)
    sc = jnp.where(sc == 1.0, 0.99, sc)

    remaining_dived = (1.0 - sc) / (N_CLASSES - 1)                     # (TB, 1)

    # new_logits: log(remaining_dived)+1 everywhere, log(sc)+1 at predicted class
    out = jnp.where(col == pred,
                    jnp.log(sc) + 1.0,
                    jnp.log(remaining_dived) + 1.0)
    # TODO(synk): output stays f32/(B,128)-padded per-row full rows to match the
    # module; a bf16 or per-row compressed (pred, log_sc, log_rem) output would
    # cut the dominant HBM write 2-40x -- interface change for the model owner.
    out_ref[...] = out.astype(out_ref.dtype)


def splines_model_forward(x, w, b, knots_x, knots_y, *, tb=2048, return_padded=False):
    """x:(B,D) f32, w:(D,C) f32, b:(1,C) f32, knots_*:(1,NK) f32 -> (B,C) f32.

    With return_padded=True the (B, 128) lane-padded result is returned as-is
    (columns >= C hold the off-class value), avoiding the extra HBM slice pass.
    """
    B, D = x.shape
    C = w.shape[1]
    NK = int(np.asarray(knots_x).reshape(-1).shape[0])

    # --- lane-dense class padding (101 -> 128): zero weights, NEG_INF bias ---
    C_pad = ((max(C, 128) + 127) // 128) * 128
    w_p = jnp.zeros((D, C_pad), jnp.float32).at[:, :C].set(jnp.asarray(w, jnp.float32))
    b_p = jnp.full((1, C_pad), NEG_INF, jnp.float32).at[:, :C].set(
        jnp.asarray(b, jnp.float32).reshape(1, C))

    x = jnp.asarray(x, jnp.float32)   # passed straight through: no cast/pad pass

    # --- knot table: [kx; ky; line-coef A; line-coef B], precomputed in float64 ---
    # interp(s) = (beta*y[i] + alpha*y[i-1]) / (alpha+beta)  ==  A[i] + B[i]*s
    # (keeps the original, intentionally swapped-weight formula).
    # TODO(synk): the Spline lstsq fit itself (set_splines) is host-side
    # calibration, not part of the forward hot path; only its resulting
    # piecewise-linear function is evaluated in-kernel.
    kx64 = np.asarray(knots_x, np.float64).reshape(-1)
    ky64 = np.asarray(knots_y, np.float64).reshape(-1)
    dx = kx64[1:] - kx64[:-1]
    coef_a = (kx64[1:] * ky64[1:] - kx64[:-1] * ky64[:-1]) / dx
    coef_b = (ky64[:-1] - ky64[1:]) / dx
    coef_a = np.concatenate([coef_a[:1], coef_a])   # index 0 never used (ind >= 1)
    coef_b = np.concatenate([coef_b[:1], coef_b])
    knots = jnp.asarray(np.stack([kx64, ky64, coef_a, coef_b]).astype(np.float32))

    # --- batch tile: multiple of 8, >= 2 grid steps when B allows (v7x megacore),
    # ragged last block handled by Pallas (no batch-pad copy of x). ---
    TB = max(8, (int(tb) // 8) * 8)
    if B > 8:
        half = (((B + 1) // 2) + 7) // 8 * 8     # ceil(B/2) rounded up to mult of 8
        TB = min(TB, half)
    else:
        TB = 8
    grid = (pl.cdiv(B, TB),)

    cost = pl.CostEstimate(
        flops=2 * B * D * C_pad,
        transcendentals=B * (C_pad + 4),
        bytes_accessed=B * 4 * (D + C_pad) + 4 * (D + 1) * C_pad + 4 * 4 * NK,
    )

    out = pl.pallas_call(
        _splines_kernel,
        out_shape=jax.ShapeDtypeStruct((B, C_pad), jnp.float32),
        grid_spec=pl.GridSpec(
            grid=grid,
            in_specs=[
                pl.BlockSpec((TB, D), lambda i: (i, 0)),       # x: tiled over batch
                pl.BlockSpec((D, C_pad), lambda i: (0, 0)),    # w: VMEM-resident
                pl.BlockSpec((1, C_pad), lambda i: (0, 0)),    # b: VMEM-resident
                pl.BlockSpec((4, NK), lambda i: (0, 0)),       # knot table: resident
            ],
            out_specs=pl.BlockSpec((TB, C_pad), lambda i: (i, 0)),
        ),
        compiler_params=pltpu.CompilerParams(
            dimension_semantics=("parallel",),                 # rows independent -> megacore
            vmem_limit_bytes=32 * 1024 * 1024,
        ),
        cost_estimate=cost,
    )(x, w_p, b_p, knots)

    if return_padded:
        return out            # (B, C_pad): avoids the extra HBM slice pass
    return out[:, :C]         # module-faithful (B, 101)


def reference_forward(x, w, b, knots_x, knots_y):
    """Pure numpy mirror of SplinesModel.forward/calibrate (f32)."""
    x = np.asarray(x, np.float32); w = np.asarray(w, np.float32)
    b = np.asarray(b, np.float32)
    kx1 = np.asarray(knots_x, np.float32).reshape(-1)
    ky1 = np.asarray(knots_y, np.float32).reshape(-1)
    logits = x @ w + b
    sm = np.exp(logits - logits.max(1, keepdims=True))
    sm = sm / sm.sum(1, keepdims=True)
    scores1 = sm.max(1)
    preds = sm.argmax(1)
    out = np.zeros_like(sm)
    for j in range(sm.shape[0]):
        s = float(scores1[j])
        if s >= kx1[-1]:
            sc = float(ky1[-1])
        elif s <= kx1[0]:
            sc = float(ky1[0])
        else:
            ind = int(np.searchsorted(kx1, s, side="left"))  # first_above
            alpha = s - kx1[ind - 1]
            beta = kx1[ind] - s
            sc = float((beta * ky1[ind] + alpha * ky1[ind - 1]) / (alpha + beta))
        if sc < 0.0:
            sc = 1.0 / N_CLASSES
        if sc > 1.0:
            sc = 1.0
        if sc == 1.0:
            sc = 0.99
        rem = (1.0 - sc) / (N_CLASSES - 1)
        row = np.full((sm.shape[1],), np.log(rem) + 1.0, dtype=np.float32)
        row[preds[j]] = np.log(sc) + 1.0
        out[j] = row
    return out


if __name__ == "__main__":
    B, D, C, NK = 256, 32, N_CLASSES, 16

    key = jax.random.PRNGKey(0)
    kx_key, kw, kb = jax.random.split(key, 3)

    x = jax.random.normal(kx_key, (B, D), dtype=jnp.float32)
    w = jax.random.normal(kw, (D, C), dtype=jnp.float32) * 0.5
    b = jax.random.normal(kb, (1, C), dtype=jnp.float32) * 0.1

    # Deterministic recalibration knots (stand-in for the host-side set_splines fit).
    knots_x = jnp.linspace(1.0 / C, 0.999, NK, dtype=jnp.float32).reshape(1, NK)
    knots_y = (1.1 * knots_x - 0.015).astype(jnp.float32)

    # Padded output path (no device-side slice); slice host-side only for checking.
    out_padded = splines_model_forward(x, w, b, knots_x, knots_y, return_padded=True)
    out_padded = jax.block_until_ready(out_padded)
    out = np.asarray(out_padded)[:, :C]

    ref = reference_forward(np.asarray(x), np.asarray(w), np.asarray(b), knots_x, knots_y)
    np.testing.assert_allclose(out, ref, rtol=2e-4, atol=2e-4)

    print("KERNEL_OK")
</pallas_src>

<mosaic_0001>
module attributes {stable_mosaic.version = 11 : i64} {
  func.func @_splines_kernel(%arg0: i32, %arg1: memref<128x32xf32, #tpu.memory_space<vmem>>, %arg2: memref<32x128xf32, #tpu.memory_space<vmem>>, %arg3: memref<1x128xf32, #tpu.memory_space<vmem>>, %arg4: memref<4x16xf32, #tpu.memory_space<vmem>>, %arg5: memref<128x128xf32, #tpu.memory_space<vmem>>) attributes {dimension_semantics = [#tpu.dimension_semantics<parallel>], iteration_bounds = array<i64: 2>, scalar_prefetch = 0 : i64, scratch_operands = 0 : i64, tpu.core_type = #tpu.core_type<tc>, window_params = [{transform_indices = @transform_0, window_bounds = array<i64: 128, 32>}, {pipeline_mode = #tpu.pipeline_mode<synchronous>, transform_indices = @transform_1, window_bounds = array<i64: 32, 128>}, {pipeline_mode = #tpu.pipeline_mode<synchronous>, transform_indices = @transform_2, window_bounds = array<i64: 1, 128>}, {pipeline_mode = #tpu.pipeline_mode<synchronous>, transform_indices = @transform_3, window_bounds = array<i64: 4, 16>}, {transform_indices = @transform_4, window_bounds = array<i64: 128, 128>}]} {
    %c0 = arith.constant 0 : index
    %c0_0 = arith.constant 0 : index
    %0 = vector.load %arg1[%c0, %c0_0] : memref<128x32xf32, #tpu.memory_space<vmem>>, vector<128x32xf32>
    %c0_1 = arith.constant 0 : index
    %c0_2 = arith.constant 0 : index
    %1 = vector.load %arg2[%c0_1, %c0_2] : memref<32x128xf32, #tpu.memory_space<vmem>>, vector<32x128xf32>
    %c0_3 = arith.constant 0 : index
    %c0_4 = arith.constant 0 : index
    %2 = vector.load %arg3[%c0_3, %c0_4] : memref<1x128xf32, #tpu.memory_space<vmem>>, vector<1x128xf32>
    %cst = arith.constant dense<0.000000e+00> : vector<128x128xf32>
    %3 = tpu.matmul %0, %1, %cst {dimension_numbers = #tpu.dot_dimension_numbers<[1], [0], [0], [1], [0, 0, 1, 1], [], []>, precision = #tpu.contract_precision<fp32>} : vector<128x32xf32>, vector<32x128xf32>, vector<128x128xf32> -> vector<128x128xf32>
    %4 = vector.broadcast %2 : vector<1x128xf32> to vector<128x128xf32>
    %5 = arith.addf %3, %4 : vector<128x128xf32>
    %cst_5 = arith.constant dense<0xFF800000> : vector<128xf32>
    %6 = vector.multi_reduction <maximumf>, %5, %cst_5 [1] : vector<128x128xf32> to vector<128xf32>
    %7 = vector.shape_cast %6 : vector<128xf32> to vector<128x1xf32>
    %8 = tpu.iota {dimensions = array<i32: 1>} : vector<128x128xi32>
    %9 = vector.broadcast %7 : vector<128x1xf32> to vector<128x128xf32>
    %10 = arith.cmpf oeq, %5, %9 : vector<128x128xf32>
    %c128_i32 = arith.constant 128 : i32
    %11 = vector.broadcast %c128_i32 : i32 to vector<128x128xi32>
    %12 = arith.select %10, %8, %11 : vector<128x128xi1>, vector<128x128xi32>
    %cst_6 = arith.constant dense<2147483647> : vector<128xi32>
    %13 = vector.multi_reduction <minsi>, %12, %cst_6 [1] : vector<128x128xi32> to vector<128xi32>
    %14 = vector.shape_cast %13 : vector<128xi32> to vector<128x1xi32>
    %15 = vector.broadcast %7 : vector<128x1xf32> to vector<128x128xf32>
    %16 = arith.subf %5, %15 : vector<128x128xf32>
    %17 = math.exp %16 : vector<128x128xf32>
    %cst_7 = arith.constant dense<0.000000e+00> : vector<128xf32>
    %18 = vector.multi_reduction <add>, %17, %cst_7 [1] : vector<128x128xf32> to vector<128xf32>
    %19 = vector.shape_cast %18 : vector<128xf32> to vector<128x1xf32>
    %cst_8 = arith.constant 1.000000e+00 : f32
    %20 = vector.broadcast %cst_8 : f32 to vector<128x1xf32>
    %21 = arith.divf %20, %19 : vector<128x1xf32>
    %c0_9 = arith.constant 0 : index
    %c0_10 = arith.constant 0 : index
    %22 = vector.load %arg4[%c0_9, %c0_10] : memref<4x16xf32, #tpu.memory_space<vmem>>, vector<4x16xf32>
    %23 = vector.extract_strided_slice %22 {offsets = [0, 0], sizes = [1, 16], strides = [1, 1]} : vector<4x16xf32> to vector<1x16xf32>
    %24 = vector.extract_strided_slice %22 {offsets = [1, 0], sizes = [1, 16], strides = [1, 1]} : vector<4x16xf32> to vector<1x16xf32>
    %25 = vector.extract_strided_slice %22 {offsets = [2, 0], sizes = [1, 16], strides = [1, 1]} : vector<4x16xf32> to vector<1x16xf32>
    %26 = vector.extract_strided_slice %22 {offsets = [3, 0], sizes = [1, 16], strides = [1, 1]} : vector<4x16xf32> to vector<1x16xf32>
    %27 = vector.broadcast %23 : vector<1x16xf32> to vector<128x16xf32>
    %28 = vector.broadcast %21 : vector<128x1xf32> to vector<128x16xf32>
    %29 = arith.cmpf olt, %27, %28 : vector<128x16xf32>
    %30 = arith.extui %29 : vector<128x16xi1> to vector<128x16xi32>
    %cst_11 = arith.constant dense<0> : vector<128xi32>
    %31 = vector.multi_reduction <add>, %30, %cst_11 [1] : vector<128x16xi32> to vector<128xi32>
    %32 = vector.shape_cast %31 : vector<128xi32> to vector<128x1xi32>
    %c1_i32 = arith.constant 1 : i32
    %c15_i32 = arith.constant 15 : i32
    %33 = vector.broadcast %c1_i32 : i32 to vector<128x1xi32>
    %34 = arith.maxsi %33, %32 : vector<128x1xi32>
    %35 = vector.broadcast %c15_i32 : i32 to vector<128x1xi32>
    %36 = arith.minsi %35, %34 : vector<128x1xi32>
    %37 = tpu.iota {dimensions = array<i32: 1>} : vector<128x16xi32>
    %38 = vector.broadcast %36 : vector<128x1xi32> to vector<128x16xi32>
    %39 = arith.cmpi eq, %37, %38 : vector<128x16xi32>
    %40 = arith.extui %39 : vector<128x16xi1> to vector<128x16xi32>
    %41 = arith.sitofp %40 : vector<128x16xi32> to vector<128x16xf32>
    %42 = vector.broadcast %26 : vector<1x16xf32> to vector<128x16xf32>
    %43 = vector.broadcast %21 : vector<128x1xf32> to vector<128x16xf32>
    %44 = arith.mulf %42, %43 : vector<128x16xf32>
    %45 = vector.broadcast %25 : vector<1x16xf32> to vector<128x16xf32>
    %46 = arith.addf %45, %44 : vector<128x16xf32>
    %47 = arith.mulf %41, %46 : vector<128x16xf32>
    %cst_12 = arith.constant dense<0.000000e+00> : vector<128xf32>
    %48 = vector.multi_reduction <add>, %47, %cst_12 [1] : vector<128x16xf32> to vector<128xf32>
    %49 = vector.shape_cast %48 : vector<128xf32> to vector<128x1xf32>
    %50 = vector.extract_strided_slice %23 {offsets = [0, 0], sizes = [1, 1], strides = [1, 1]} : vector<1x16xf32> to vector<1x1xf32>
    %51 = vector.extract_strided_slice %23 {offsets = [0, 15], sizes = [1, 1], strides = [1, 1]} : vector<1x16xf32> to vector<1x1xf32>
    %52 = vector.extract_strided_slice %24 {offsets = [0, 0], sizes = [1, 1], strides = [1, 1]} : vector<1x16xf32> to vector<1x1xf32>
    %53 = vector.extract_strided_slice %24 {offsets = [0, 15], sizes = [1, 1], strides = [1, 1]} : vector<1x16xf32> to vector<1x1xf32>
    %54 = vector.broadcast %51 : vector<1x1xf32> to vector<128x1xf32>
    %55 = arith.cmpf oge, %21, %54 : vector<128x1xf32>
    %56 = vector.broadcast %50 : vector<1x1xf32> to vector<128x1xf32>
    %57 = arith.cmpf ole, %21, %56 : vector<128x1xf32>
    %58 = vector.shape_cast %52 : vector<1x1xf32> to vector<1x1xf32>
    %59 = vector.broadcast %58 : vector<1x1xf32> to vector<128x1xf32>
    %60 = arith.select %57, %59, %49 : vector<128x1xi1>, vector<128x1xf32>
    %61 = vector.shape_cast %53 : vector<1x1xf32> to vector<1x1xf32>
    %62 = vector.broadcast %61 : vector<1x1xf32> to vector<128x1xf32>
    %63 = arith.select %55, %62, %60 : vector<128x1xi1>, vector<128x1xf32>
    %cst_13 = arith.constant 0.000000e+00 : f32
    %64 = vector.broadcast %cst_13 : f32 to vector<128x1xf32>
    %65 = arith.cmpf olt, %63, %64 : vector<128x1xf32>
    %cst_14 = arith.constant 9.900990e-03 : f32
    %66 = vector.broadcast %cst_14 : f32 to vector<128x1xf32>
    %67 = arith.select %65, %66, %63 : vector<128x1xi1>, vector<128x1xf32>
    %cst_15 = arith.constant 1.000000e+00 : f32
    %68 = vector.broadcast %cst_15 : f32 to vector<128x1xf32>
    %69 = arith.cmpf ogt, %67, %68 : vector<128x1xf32>
    %cst_16 = arith.constant 1.000000e+00 : f32
    %70 = vector.broadcast %cst_16 : f32 to vector<128x1xf32>
    %71 = arith.select %69, %70, %67 : vector<128x1xi1>, vector<128x1xf32>
    %cst_17 = arith.constant 1.000000e+00 : f32
    %72 = vector.broadcast %cst_17 : f32 to vector<128x1xf32>
    %73 = arith.cmpf oeq, %71, %72 : vector<128x1xf32>
    %cst_18 = arith.constant 9.900000e-01 : f32
    %74 = vector.broadcast %cst_18 : f32 to vector<128x1xf32>
    %75 = arith.select %73, %74, %71 : vector<128x1xi1>, vector<128x1xf32>
    %cst_19 = arith.constant 1.000000e+00 : f32
    %76 = vector.broadcast %cst_19 : f32 to vector<128x1xf32>
    %77 = arith.subf %76, %75 : vector<128x1xf32>
    %cst_20 = arith.constant 1.000000e+02 : f32
    %78 = vector.broadcast %cst_20 : f32 to vector<128x1xf32>
    %79 = arith.divf %77, %78 : vector<128x1xf32>
    %80 = vector.broadcast %14 : vector<128x1xi32> to vector<128x128xi32>
    %81 = arith.cmpi eq, %8, %80 : vector<128x128xi32>
    %82 = math.log %75 : vector<128x1xf32>
    %cst_21 = arith.constant 1.000000e+00 : f32
    %83 = vector.broadcast %cst_21 : f32 to vector<128x1xf32>
    %84 = arith.addf %82, %83 : vector<128x1xf32>
    %85 = math.log %79 : vector<128x1xf32>
    %cst_22 = arith.constant 1.000000e+00 : f32
    %86 = vector.broadcast %cst_22 : f32 to vector<128x1xf32>
    %87 = arith.addf %85, %86 : vector<128x1xf32>
    %88 = vector.shape_cast %84 : vector<128x1xf32> to vector<128x1xf32>
    %89 = vector.broadcast %88 : vector<128x1xf32> to vector<128x128xf32>
    %90 = vector.shape_cast %87 : vector<128x1xf32> to vector<128x1xf32>
    %91 = vector.broadcast %90 : vector<128x1xf32> to vector<128x128xf32>
    %92 = arith.select %81, %89, %91 : vector<128x128xi1>, vector<128x128xf32>
    %c0_23 = arith.constant 0 : index
    %c0_24 = arith.constant 0 : index
    %93 = vector.load %arg5[%c0_23, %c0_24] : memref<128x128xf32, #tpu.memory_space<vmem>>, vector<128x128xf32>
    tpu.vector_store %arg5[%c0_23, %c0_24], %92 {strides = array<i32>} : memref<128x128xf32, #tpu.memory_space<vmem>>, vector<128x128xf32>,
    return
  }
  func.func @transform_0(%arg0: i32) -> (i32, i32) {
    %c0_i32 = arith.constant 0 : i32
    %c0_i32_0 = arith.constant 0 : i32
    return %arg0, %c0_i32 : i32, i32
  }
  func.func @transform_1(%arg0: i32) -> (i32, i32) {
    %c0_i32 = arith.constant 0 : i32
    %c0_i32_0 = arith.constant 0 : i32
    %c0_i32_1 = arith.constant 0 : i32
    return %c0_i32, %c0_i32_0 : i32, i32
  }
  func.func @transform_2(%arg0: i32) -> (i32, i32) {
    %c0_i32 = arith.constant 0 : i32
    %c0_i32_0 = arith.constant 0 : i32
    %c0_i32_1 = arith.constant 0 : i32
    return %c0_i32, %c0_i32_0 : i32, i32
  }
  func.func @transform_3(%arg0: i32) -> (i32, i32) {
    %c0_i32 = arith.constant 0 : i32
    %c0_i32_0 = arith.constant 0 : i32
    %c0_i32_1 = arith.constant 0 : i32
    return %c0_i32, %c0_i32_0 : i32, i32
  }
  func.func @transform_4(%arg0: i32) -> (i32, i32) {
    %c0_i32 = arith.constant 0 : i32
    %c0_i32_0 = arith.constant 0 : i32
    return %arg0, %c0_i32 : i32, i32
  }
}

</mosaic_0001>

<llo_original>
// kernel: tpu_custom_call.1
$region0: #{tpu_custom_call.1}
  #allocation0 [shape = 'u32[]', space=smem, size = 0x4, offset = 0x4, fixed_abs, tag = 'smem constant byte address 0x4 - core index']
  #allocation1 [shape = 'u32[144,128]{1,0:T(1,128)}', space=vmem, size = 0x12000, scoped, tag = 'internal scratch']
  %s0 = inlined_call_operand.vmem [shape: f32[256,32], index: 0, kind: input, shape index: {}]
  %s1 = inlined_call_operand.vmem [shape: f32[32,128], index: 1, kind: input, shape index: {}]
  %s2 = inlined_call_operand.vmem [shape: f32[1,128], index: 2, kind: input, shape index: {}]
  %s3 = inlined_call_operand.vmem [shape: f32[4,16], index: 3, kind: input, shape index: {}]
  %s4 = inlined_call_operand.hbm [shape: f32[256,128], index: 4, kind: output, shape index: {}]
  %s5 = sld [smem:[#allocation0]]
  $region49: #{tpu_custom_call.1} parent=0
    _
  %s7 = ssub.s32 1, %s5
  %s8 = scalar_select 0, %s7, %s5
  $region1: #{tpu_custom_call.1} parent=0
    #allocation2 [shape = 'u8[131072]{0}', space=vmem, size = 0x20000, scoped, tag = 'output window, operand 0']
    #allocation3 [shape = 's32[2]{0}', space=sflag, size = 0x8, scoped, tag = 'scoped memory for tpu_custom_call.1']
    %9 = vsyncpa [#allocation3], 0
    %s10 = scalar_lea.sflag [#allocation3], 1
    %11 = vsyncpa %s10, 0
    loop: start=0, step=1, limit=4
    $region2: #{tpu_custom_call.1} parent=1 // loop_pre_header
      _
    $region3: #{tpu_custom_call.1} parent=1 // loop_header
      %s13 = sphi 0, %s17
      %p14 = scmp.ge.s32.totalorder %s13, 4
      %s23 = sphi 0, %s25
      %s26 = sphi 0, %s23
      %s27 = sphi 0, %s26
      %s43 = sphi 0, %s27
      %s47 = sphi 0, %s47
      %s49 = sphi 0, %s47
      %s50 = sphi 0, %s49
      %s64 = sphi 0, %s50
      %s68 = sphi 0, %s68
      %s70 = sphi 0, %s68
      %s71 = sphi 0, %s70
      %s85 = sphi 0, %s71
      %s89 = sphi 0, %s89
      %s91 = sphi 0, %s89
      %s92 = sphi 0, %s91
      %s106 = sphi 0, %s92
      %s112 = sphi 0, %s114
      %s115 = sphi 0, %s112
      %s116 = sphi 0, %s115
      %s132 = sphi 0, %s116
    $region4: #{tpu_custom_call.1} parent=1 // loop_header_branch
      %16 = sbr.rel (%p14) target = $region8
    $region5: #{tpu_custom_call.1} parent=1 // loop_body
      %s18 = ssub.s32 %s13, 1
      %s19 = ssub.s32 %s13, 2
      %s20 = sadd.s32 %s13, 1
      %s21 = ssub.s32 %s13, %s20
      %p22 = scmp.eq.s32.totalorder %s21, 0
      %s24 = sadd.s32 %s23, 1
      %s25 = scalar_select %p22, %s23, %s24
      %p28 = pneg %p22
      %p29 = scmp.eq.s32.totalorder %s13, 1
      %p30 = por %p28, %p29
      %p31 = scmp.ne.s32.totalorder %s23, %s26
      %p32 = scmp.eq.s32.totalorder %s13, 0
      %p33 = por %p31, %p32
      %p34 = scmp.ne.s32.totalorder %s23, %s26
      %p35 = scmp.eq.s32.totalorder %s18, 1
      %p36 = por %p34, %p35
      %p37 = scmp.ne.s32.totalorder %s26, %s27
      %p38 = scmp.eq.s32.totalorder %s18, 0
      %p39 = por %p37, %p38
      %p40 = scmp.ne.s32.totalorder %s26, %s27
      %p41 = scmp.eq.s32.totalorder %s19, 1
      %p42 = por %p40, %p41
      %p44 = scmp.ne.s32.totalorder %s27, %s43
      %p45 = scmp.eq.s32.totalorder %s19, 0
      %p46 = por %p44, %p45
      %s48 = sadd.s32 %s47, 1
      %p51 = scmp.eq.s32.totalorder %s13, 1
      %p52 = scmp.ne.s32.totalorder %s47, %s49
      %p53 = scmp.eq.s32.totalorder %s13, 0
      %p54 = por %p52, %p53
      %p55 = scmp.ne.s32.totalorder %s47, %s49
      %p56 = scmp.eq.s32.totalorder %s18, 1
      %p57 = por %p55, %p56
      %p58 = scmp.ne.s32.totalorder %s49, %s50
      %p59 = scmp.eq.s32.totalorder %s18, 0
      %p60 = por %p58, %p59
      %p61 = scmp.ne.s32.totalorder %s49, %s50
      %p62 = scmp.eq.s32.totalorder %s19, 1
      %p63 = por %p61, %p62
      %p65 = scmp.ne.s32.totalorder %s50, %s64
      %p66 = scmp.eq.s32.totalorder %s19, 0
      %p67 = por %p65, %p66
      %s69 = sadd.s32 %s68, 1
      %p72 = scmp.eq.s32.totalorder %s13, 1
      %p73 = scmp.ne.s32.totalorder %s68, %s70
      %p74 = scmp.eq.s32.totalorder %s13, 0
      %p75 = por %p73, %p74
      %p76 = scmp.ne.s32.totalorder %s68, %s70
      %p77 = scmp.eq.s32.totalorder %s18, 1
      %p78 = por %p76, %p77
      %p79 = scmp.ne.s32.totalorder %s70, %s71
      %p80 = scmp.eq.s32.totalorder %s18, 0
      %p81 = por %p79, %p80
      %p82 = scmp.ne.s32.totalorder %s70, %s71
      %p83 = scmp.eq.s32.totalorder %s19, 1
      %p84 = por %p82, %p83
      %p86 = scmp.ne.s32.totalorder %s71, %s85
      %p87 = scmp.eq.s32.totalorder %s19, 0
      %p88 = por %p86, %p87
      %s90 = sadd.s32 %s89, 1
      %p93 = scmp.eq.s32.totalorder %s13, 1
      %p94 = scmp.ne.s32.totalorder %s89, %s91
      %p95 = scmp.eq.s32.totalorder %s13, 0
      %p96 = por %p94, %p95
      %p97 = scmp.ne.s32.totalorder %s89, %s91
      %p98 = scmp.eq.s32.totalorder %s18, 1
      %p99 = por %p97, %p98
      %p100 = scmp.ne.s32.totalorder %s91, %s92
      %p101 = scmp.eq.s32.totalorder %s18, 0
      %p102 = por %p100, %p101
      %p103 = scmp.ne.s32.totalorder %s91, %s92
      %p104 = scmp.eq.s32.totalorder %s19, 1
      %p105 = por %p103, %p104
      %p107 = scmp.ne.s32.totalorder %s92, %s106
      %p108 = scmp.eq.s32.totalorder %s19, 0
      %p109 = por %p107, %p108
      %s110 = ssub.s32 %s13, %s20
      %p111 = scmp.eq.s32.totalorder %s110, 0
      %s113 = sadd.s32 %s112, 1
      %s114 = scalar_select %p111, %s112, %s113
      %p117 = pneg %p111
      %p118 = scmp.eq.s32.totalorder %s13, 1
      %p119 = por %p117, %p118
      %p120 = scmp.ne.s32.totalorder %s112, %s115
      %p121 = scmp.eq.s32.totalorder %s13, 0
      %p122 = por %p120, %p121
      %p123 = scmp.ne.s32.totalorder %s112, %s115
      %p124 = scmp.eq.s32.totalorder %s18, 1
      %p125 = por %p123, %p124
      %p126 = scmp.ne.s32.totalorder %s115, %s116
      %p127 = scmp.eq.s32.totalorder %s18, 0
      %p128 = por %p126, %p127
      %p129 = scmp.ne.s32.totalorder %s115, %s116
      %p130 = scmp.eq.s32.totalorder %s19, 1
      %p131 = por %p129, %p130
      %p133 = scmp.ne.s32.totalorder %s116, %s132
      %p134 = scmp.eq.s32.totalorder %s19, 0
      %p135 = por %p133, %p134
      %p136 = scmp.le.s32.totalorder 1, %s13
      %p137 = scmp.lt.s32.totalorder %s13, 3
      %p138 = pnand %p136, %p137
      %p139 = pneg %p138
      // Predicated region
      $region9: #{tpu_custom_call.1} parent=5 // pred_check
        _
      $region10: #{tpu_custom_call.1} parent=5 // pred_check_branch
        %141 = sbr.rel (%p138) target = $region12
      $region11: #{tpu_custom_call.1} parent=5 // pred_region
        %s142 = ssub.s32 %s13, 1
        // Predicated region
        $region13: #{tpu_custom_call.1} parent=11 // pred_check
          %p143 = pneg %p60
        $region14: #{tpu_custom_call.1} parent=11 // pred_check_branch
          %145 = sbr.rel (%p143) target = $region16
        $region15: #{tpu_custom_call.1} parent=11 // pred_region
          _
        $region16: #{tpu_custom_call.1} parent=11 // pred_fallthru
          _
        // Predicated region
        $region17: #{tpu_custom_call.1} parent=11 // pred_check
          %p146 = pneg %p81
        $region18: #{tpu_custom_call.1} parent=11 // pred_check_branch
          %148 = sbr.rel (%p146) target = $region20
        $region19: #{tpu_custom_call.1} parent=11 // pred_region
          _
        $region20: #{tpu_custom_call.1} parent=11 // pred_fallthru
          _
        // Predicated region
        $region21: #{tpu_custom_call.1} parent=11 // pred_check
          %p149 = pneg %p102
        $region22: #{tpu_custom_call.1} parent=11 // pred_check_branch
          %151 = sbr.rel (%p149) target = $region24
        $region23: #{tpu_custom_call.1} parent=11 // pred_region
          _
        $region24: #{tpu_custom_call.1} parent=11 // pred_fallthru
          _
      $region12: #{tpu_custom_call.1} parent=5 // pred_fallthru
        _
      %p152 = scmp.lt.s32.totalorder %s13, 2
      // Predicated region
      $region25: #{tpu_custom_call.1} parent=5 // pred_check
        %p153 = pneg %p152
      $region26: #{tpu_custom_call.1} parent=5 // pred_check_branch
        %155 = sbr.rel (%p153) target = $region28
      $region27: #{tpu_custom_call.1} parent=5 // pred_region
        // Predicated region
        $region29: #{tpu_custom_call.1} parent=27 // pred_check
          %p156 = pneg %p33
        $region30: #{tpu_custom_call.1} parent=27 // pred_check_branch
          %158 = sbr.rel (%p156) target = $region32
        $region31: #{tpu_custom_call.1} parent=27 // pred_region
          %s159 = smul.u32 16, %s13
          %p160 = scmp.lt.s32.totalorder %s159, 31
          %s161 = scalar_select %p160, %s159, 31
          %s162 = smul.addr %s161, 8
          %s163 = scalar_lea.vmem %s0, %s162
          %s164 = smul.u32 16, %s13
        $region32: #{tpu_custom_call.1} parent=27 // pred_fallthru
          _
      $region28: #{tpu_custom_call.1} parent=5 // pred_fallthru
        _
      %p165 = scmp.le.s32.totalorder 1, %s13
      %p166 = scmp.lt.s32.totalorder %s13, 3
      %p167 = pnand %p165, %p166
      %p168 = pneg %p167
      // Predicated region
      $region33: #{tpu_custom_call.1} parent=5 // pred_check
        _
      $region34: #{tpu_custom_call.1} parent=5 // pred_check_branch
        %170 = sbr.rel (%p167) target = $region36
      $region35: #{tpu_custom_call.1} parent=5 // pred_region
        %s171 = ssub.s32 %s13, 1
        %s172 = smul.u32 16, %s18
        %p173 = scmp.lt.s32.totalorder %s172, 31
        %s174 = scalar_select %p173, %s172, 31
        %s175 = smul.addr %s174, 8
        %s176 = scalar_lea.vmem %s0, %s175
        %p177 = pneg %p39
        %p178 = pneg %p36
        %p179 = pneg %p60
        %p180 = pneg %p57
        %p181 = pneg %p81
        %p182 = pneg %p78
        %p183 = pneg %p102
        %p184 = pneg %p99
        %p185 = pneg %p128
        %p186 = pneg %p125
        %s187 = sand.u32 %s115, 1
        %s188 = scalar_lea.sflag [#allocation3], %s187
        %s189 = sand.u32 %s115, 1
        %s190 = smul.addr %s189, 128
        %s191 = scalar_lea.vmem [#allocation2], %s190
        %s192 = smul.u32 16, %s18
        %p193 = scmp.lt.s32.totalorder %s192, 31
        %s194 = scalar_select %p193, %s192, 31
        %s195 = smul.addr %s194, 8
        %s196 = scalar_lea.vmem %s0, %s195
        %s197 = smul.u32 16, %s18
        %s198 = smul.u32 16, %s18
        %v199 = vld [vmem:[%s196] sm:$0xff]
        %v200 = vld [vmem:[%s196 + $0x8] sm:$0xff]
        %v201 = vld [vmem:[%s196 + $0x10] sm:$0xff]
        %v202 = vld [vmem:[%s196 + $0x18] sm:$0xff]
        %v203 = vld [vmem:[%s196 + $0x20] sm:$0xff]
        %v204 = vld [vmem:[%s196 + $0x28] sm:$0xff]
        %v205 = vld [vmem:[%s196 + $0x30] sm:$0xff]
        %v206 = vld [vmem:[%s196 + $0x38] sm:$0xff]
        %v207 = vld [vmem:[%s196 + $0x40] sm:$0xff]
        %v208 = vld [vmem:[%s196 + $0x48] sm:$0xff]
        %v209 = vld [vmem:[%s196 + $0x50] sm:$0xff]
        %v210 = vld [vmem:[%s196 + $0x58] sm:$0xff]
        %v211 = vld [vmem:[%s196 + $0x60] sm:$0xff]
        %v212 = vld [vmem:[%s196 + $0x68] sm:$0xff]
        %v213 = vld [vmem:[%s196 + $0x70] sm:$0xff]
        %v214 = vld [vmem:[%s196 + $0x78] sm:$0xff]
        %v215 = vld [vmem:[%s1] sm:$0xff]
        %v216 = vld [vmem:[%s1 + $0x8] sm:$0xff]
        %v217 = vld [vmem:[%s1 + $0x10] sm:$0xff]
        %v218 = vld [vmem:[%s1 + $0x18] sm:$0xff]
        %v219 = vld [vmem:[%s2] sm:$0x1]
        %v221 = vlaneseq
        %v222 = vshrl.u32 %v221, 7
        %v223 = vsub.s32 0, %v222
        %v224 = vrot.slane %v219, %v223
        %vm226 = vcmask 261120
        %v228 = vsel %vm226, %v199, 0
        %v231 = vsel %vm226, %v200, 0
        %v234 = vsel %vm226, %v201, 0
        %v237 = vsel %vm226, %v202, 0
        %v240 = vsel %vm226, %v203, 0
        %v243 = vsel %vm226, %v204, 0
        %v246 = vsel %vm226, %v205, 0
        %v249 = vsel %vm226, %v206, 0
        %v252 = vsel %vm226, %v207, 0
        %v255 = vsel %vm226, %v208, 0
        %v258 = vsel %vm226, %v209, 0
        %v261 = vsel %vm226, %v210, 0
        %v264 = vsel %vm226, %v211, 0
        %v267 = vsel %vm226, %v212, 0
        %v270 = vsel %vm226, %v213, 0
        %v273 = vsel %vm226, %v214, 0
        %275 = vmatprep.subr.mxu0 0.0
        %v276 = vand.u32 %v215, 4294901760
        %277 = vmatpush1.msra.mxu0 %v276
        %278 = vmatprep.subr.mxu0 0.0
        %v279 = vand.u32 %v216, 4294901760
        %280 = vmatpush1.msra.mxu0 %v279
        %281 = vmatprep.subr.mxu0 0.0
        %v282 = vand.u32 %v217, 4294901760
        %283 = vmatpush1.msra.mxu0 %v282
        %284 = vmatprep.subr.mxu0 0.0
        %v285 = vand.u32 %v218, 4294901760
        %286 = vmatpush1.msra.mxu0 %v285
        %287 = vmatprep.subr.mxu0 0.0
        %288 = vmatpush1.msra.mxu0 0.0
        %289 = vmatprep.subr.mxu0 0.0
        %290 = vmatpush1.msra.mxu0 0.0
        %291 = vmatprep.subr.mxu0 0.0
        %292 = vmatpush1.msra.mxu0 0.0
        %293 = vmatprep.subr.mxu0 0.0
        %294 = vmatpush1.msra.mxu0 0.0
        %295 = vmatprep.subr.mxu0 0.0
        %296 = vmatpush1.msra.mxu0 0.0
        %297 = vmatprep.subr.mxu0 0.0
        %298 = vmatpush1.msra.mxu0 0.0
        %299 = vmatprep.subr.mxu0 0.0
        %300 = vmatpush1.msra.mxu0 0.0
        %301 = vmatprep.subr.mxu0 0.0
        %302 = vmatpush1.msra.mxu0 0.0
        %303 = vmatprep.subr.mxu0 0.0
        %304 = vmatpush1.msra.mxu0 0.0
        %305 = vmatprep.subr.mxu0 0.0
        %306 = vmatpush1.msra.mxu0 0.0
        %307 = vmatprep.subr.mxu0 0.0
        %308 = vmatpush1.msra.mxu0 0.0
        %309 = vmatprep.subr.mxu0 0.0
        %310 = vmatpush1.msra.mxu0 0.0
        %311 = vmatprep.subr.mxu0 0.0
        %312 = vmatpush1.msra.mxu0 0.0
        %313 = vmatprep.subr.mxu0 0.0
        %314 = vmatpush1.msra.mxu0 0.0
        %315 = vmatprep.subr.mxu0 0.0
        %316 = vmatpush1.msra.mxu0 0.0
        %317 = vmatprep.subr.mxu0 0.0
        %318 = vmatpush1.msra.mxu0 0.0
        %319 = vmatprep.subr.mxu0 0.0
        %320 = vmatpush1.msra.mxu0 0.0
        %321 = vmatprep.subr.mxu0 0.0
        %322 = vmatpush1.msra.mxu0 0.0
        %323 = vmatprep.subr.mxu0 0.0
        %324 = vmatpush1.msra.mxu0 0.0
        %325 = vmatprep.subr.mxu0 0.0
        %326 = vmatpush1.msra.mxu0 0.0
        %327 = vmatprep.subr.mxu0 0.0
        %328 = vmatpush1.msra.mxu0 0.0
        %329 = vmatprep.subr.mxu0 0.0
        %330 = vmatpush1.msra.mxu0 0.0
        %331 = vmatprep.subr.mxu0 0.0
        %332 = vmatpush1.msra.mxu0 0.0
        %333 = vmatprep.subr.mxu0 0.0
        %334 = vmatpush1.msra.mxu0 0.0
        %335 = vmatprep.subr.mxu0 0.0
        %336 = vmatpush1.msra.mxu0 0.0
        %337 = vmatprep.subr.mxu0 0.0
        %338 = vmatpush1.msra.mxu0 0.0
        %339 = vmatprep.subr.mxu0 0.0
        %340 = vmatpush1.msra.mxu0 0.0
        %341 = vmatprep.subr.mxu0 0.0
        %342 = vmatpush1.msra.mxu0 0.0
        %343 = vmatprep.mubr.f32.mxu0 0.0
        %v344 = vand.u32 %v228, 4294901760
        %v345 = vsub.f32 %v228, %v344
        %v346 = vand.u32 %v345, 4294901760
        %v347 = vsub.f32 %v345, %v346
        %v348 = vand.u32 %v347, 4294901760
        %349 = vmatmul.mubr.f32.gmra.mrb[0].mxu0 %v348
        %v350 = vpop.f32.mrb[0].mxu0
        %v351 = vadd.f32 %v224, %v350
        %v352 = vpop.f32.mrb[0].mxu0
        %353 = vmatprep.mubr.f32.mxu0 0.0
        %v354 = vand.u32 %v231, 4294901760
        %v355 = vsub.f32 %v231, %v354
        %v356 = vand.u32 %v355, 4294901760
        %v357 = vsub.f32 %v355, %v356
        %v358 = vand.u32 %v357, 4294901760
        %359 = vmatmul.mubr.f32.gmra.mrb[0].mxu0 %v358
        %v360 = vpop.f32.mrb[0].mxu0
        %v361 = vadd.f32 %v224, %v360
        %v362 = vpop.f32.mrb[0].mxu0
        %363 = vmatprep.mubr.f32.mxu0 0.0
        %v364 = vand.u32 %v234, 4294901760
        %v365 = vsub.f32 %v234, %v364
        %v366 = vand.u32 %v365, 4294901760
        %v367 = vsub.f32 %v365, %v366
        %v368 = vand.u32 %v367, 4294901760
        %369 = vmatmul.mubr.f32.gmra.mrb[0].mxu0 %v368
        %v370 = vpop.f32.mrb[0].mxu0
        %v371 = vadd.f32 %v224, %v370
        %v372 = vpop.f32.mrb[0].mxu0
        %373 = vmatprep.mubr.f32.mxu0 0.0
        %v374 = vand.u32 %v237, 4294901760
        %v375 = vsub.f32 %v237, %v374
        %v376 = vand.u32 %v375, 4294901760
        %v377 = vsub.f32 %v375, %v376
        %v378 = vand.u32 %v377, 4294901760
        %379 = vmatmul.mubr.f32.gmra.mrb[0].mxu0 %v378
        %v380 = vpop.f32.mrb[0].mxu0
        %v381 = vadd.f32 %v224, %v380
        %v382 = vpop.f32.mrb[0].mxu0
        %383 = vmatprep.mubr.f32.mxu0 0.0
        %v384 = vand.u32 %v240, 4294901760
        %v385 = vsub.f32 %v240, %v384
        %v386 = vand.u32 %v385, 4294901760
        %v387 = vsub.f32 %v385, %v386
        %v388 = vand.u32 %v387, 4294901760
        %389 = vmatmul.mubr.f32.gmra.mrb[0].mxu0 %v388
        %v390 = vpop.f32.mrb[0].mxu0
        %v391 = vadd.f32 %v224, %v390
        %v392 = vpop.f32.mrb[0].mxu0
        %393 = vmatprep.mubr.f32.mxu0 0.0
        %v394 = vand.u32 %v243, 4294901760
        %v395 = vsub.f32 %v243, %v394
        %v396 = vand.u32 %v395, 4294901760
        %v397 = vsub.f32 %v395, %v396
        %v398 = vand.u32 %v397, 4294901760
        %399 = vmatmul.mubr.f32.gmra.mrb[0].mxu0 %v398
        %v400 = vpop.f32.mrb[0].mxu0
        %v401 = vadd.f32 %v224, %v400
        %v402 = vpop.f32.mrb[0].mxu0
        %403 = vmatprep.mubr.f32.mxu0 0.0
        %v404 = vand.u32 %v246, 4294901760
        %v405 = vsub.f32 %v246, %v404
        %v406 = vand.u32 %v405, 4294901760
        %v407 = vsub.f32 %v405, %v406
        %v408 = vand.u32 %v407, 4294901760
        %409 = vmatmul.mubr.f32.gmra.mrb[0].mxu0 %v408
        %v410 = vpop.f32.mrb[0].mxu0
        %v411 = vadd.f32 %v224, %v410
        %v412 = vpop.f32.mrb[0].mxu0
        %413 = vmatprep.mubr.f32.mxu0 0.0
        %v414 = vand.u32 %v249, 4294901760
        %v415 = vsub.f32 %v249, %v414
        %v416 = vand.u32 %v415, 4294901760
        %v417 = vsub.f32 %v415, %v416
        %v418 = vand.u32 %v417, 4294901760
        %419 = vmatmul.mubr.f32.gmra.mrb[0].mxu0 %v418
        %v420 = vpop.f32.mrb[0].mxu0
        %v421 = vadd.f32 %v224, %v420
        %v422 = vpop.f32.mrb[0].mxu0
        %423 = vmatprep.mubr.f32.mxu0 0.0
        %v424 = vand.u32 %v252, 4294901760
        %v425 = vsub.f32 %v252, %v424
        %v426 = vand.u32 %v425, 4294901760
        %v427 = vsub.f32 %v425, %v426
        %v428 = vand.u32 %v427, 4294901760
        %429 = vmatmul.mubr.f32.gmra.mrb[0].mxu0 %v428
        %v430 = vpop.f32.mrb[0].mxu0
        %v431 = vadd.f32 %v224, %v430
        %v432 = vpop.f32.mrb[0].mxu0
        %433 = vmatprep.mubr.f32.mxu0 0.0
        %v434 = vand.u32 %v255, 4294901760
        %v435 = vsub.f32 %v255, %v434
        %v436 = vand.u32 %v435, 4294901760
        %v437 = vsub.f32 %v435, %v436
        %v438 = vand.u32 %v437, 4294901760
        %439 = vmatmul.mubr.f32.gmra.mrb[0].mxu0 %v438
        %v440 = vpop.f32.mrb[0].mxu0
        %v441 = vadd.f32 %v224, %v440
        %v442 = vpop.f32.mrb[0].mxu0
        %443 = vmatprep.mubr.f32.mxu0 0.0
        %v444 = vand.u32 %v258, 4294901760
        %v445 = vsub.f32 %v258, %v444
        %v446 = vand.u32 %v445, 4294901760
        %v447 = vsub.f32 %v445, %v446
        %v448 = vand.u32 %v447, 4294901760
        %449 = vmatmul.mubr.f32.gmra.mrb[0].mxu0 %v448
        %v450 = vpop.f32.mrb[0].mxu0
        %v451 = vadd.f32 %v224, %v450
        %v452 = vpop.f32.mrb[0].mxu0
        %453 = vmatprep.mubr.f32.mxu0 0.0
        %v454 = vand.u32 %v261, 4294901760
        %v455 = vsub.f32 %v261, %v454
        %v456 = vand.u32 %v455, 4294901760
        %v457 = vsub.f32 %v455, %v456
        %v458 = vand.u32 %v457, 4294901760
        %459 = vmatmul.mubr.f32.gmra.mrb[0].mxu0 %v458
        %v460 = vpop.f32.mrb[0].mxu0
        %v461 = vadd.f32 %v224, %v460
        %v462 = vpop.f32.mrb[0].mxu0
        %463 = vmatprep.mubr.f32.mxu0 0.0
        %v464 = vand.u32 %v264, 4294901760
        %v465 = vsub.f32 %v264, %v464
        %v466 = vand.u32 %v465, 4294901760
        %v467 = vsub.f32 %v465, %v466
        %v468 = vand.u32 %v467, 4294901760
        %469 = vmatmul.mubr.f32.gmra.mrb[0].mxu0 %v468
        %v470 = vpop.f32.mrb[0].mxu0
        %v471 = vadd.f32 %v224, %v470
        %v472 = vpop.f32.mrb[0].mxu0
        %473 = vmatprep.mubr.f32.mxu0 0.0
        %v474 = vand.u32 %v267, 4294901760
        %v475 = vsub.f32 %v267, %v474
        %v476 = vand.u32 %v475, 4294901760
        %v477 = vsub.f32 %v475, %v476
        %v478 = vand.u32 %v477, 4294901760
        %479 = vmatmul.mubr.f32.gmra.mrb[0].mxu0 %v478
        %v480 = vpop.f32.mrb[0].mxu0
        %v481 = vadd.f32 %v224, %v480
        %v482 = vpop.f32.mrb[0].mxu0
        %483 = vmatprep.mubr.f32.mxu0 0.0
        %v484 = vand.u32 %v270, 4294901760
        %v485 = vsub.f32 %v270, %v484
        %v486 = vand.u32 %v485, 4294901760
        %v487 = vsub.f32 %v485, %v486
        %v488 = vand.u32 %v487, 4294901760
        %489 = vmatmul.mubr.f32.gmra.mrb[0].mxu0 %v488
        %v490 = vpop.f32.mrb[0].mxu0
        %v491 = vadd.f32 %v224, %v490
        %v492 = vpop.f32.mrb[0].mxu0
        %493 = vmatprep.mubr.f32.mxu0 0.0
        %v494 = vand.u32 %v273, 4294901760
        %v495 = vsub.f32 %v273, %v494
        %v496 = vand.u32 %v495, 4294901760
        %v497 = vsub.f32 %v495, %v496
        %v498 = vand.u32 %v497, 4294901760
        %499 = vmatmul.mubr.f32.gmra.mrb[0].mxu0 %v498
        %v500 = vpop.f32.mrb[0].mxu0
        %v501 = vadd.f32 %v224, %v500
        %v502 = vpop.f32.mrb[0].mxu0
        %503 = vdwg.mxu0
        %504 = vmatprep.subr.mxu0 0.0
        %v505 = vand.u32 %v215, 4294901760
        %v506 = vsub.f32 %v215, %v505
        %v507 = vand.u32 %v506, 4294901760
        %v508 = vsub.f32 %v506, %v507
        %v509 = vand.u32 %v508, 4294901760
        %510 = vmatpush1.msra.mxu0 %v509
        %511 = vmatprep.subr.mxu0 0.0
        %v512 = vand.u32 %v216, 4294901760
        %v513 = vsub.f32 %v216, %v512
        %v514 = vand.u32 %v513, 4294901760
        %v515 = vsub.f32 %v513, %v514
        %v516 = vand.u32 %v515, 4294901760
        %517 = vmatpush1.msra.mxu0 %v516
        %518 = vmatprep.subr.mxu0 0.0
        %v519 = vand.u32 %v217, 4294901760
        %v520 = vsub.f32 %v217, %v519
        %v521 = vand.u32 %v520, 4294901760
        %v522 = vsub.f32 %v520, %v521
        %v523 = vand.u32 %v522, 4294901760
        %524 = vmatpush1.msra.mxu0 %v523
        %525 = vmatprep.subr.mxu0 0.0
        %v526 = vand.u32 %v218, 4294901760
        %v527 = vsub.f32 %v218, %v526
        %v528 = vand.u32 %v527, 4294901760
        %v529 = vsub.f32 %v527, %v528
        %v530 = vand.u32 %v529, 4294901760
        %531 = vmatpush1.msra.mxu0 %v530
        %532 = vmatprep.subr.mxu0 0.0
        %533 = vmatpush1.msra.mxu0 0.0
        %534 = vmatprep.subr.mxu0 0.0
        %535 = vmatpush1.msra.mxu0 0.0
        %536 = vmatprep.subr.mxu0 0.0
        %537 = vmatpush1.msra.mxu0 0.0
        %538 = vmatprep.subr.mxu0 0.0
        %539 = vmatpush1.msra.mxu0 0.0
        %540 = vmatprep.subr.mxu0 0.0
        %541 = vmatpush1.msra.mxu0 0.0
        %542 = vmatprep.subr.mxu0 0.0
        %543 = vmatpush1.msra.mxu0 0.0
        %544 = vmatprep.subr.mxu0 0.0
        %545 = vmatpush1.msra.mxu0 0.0
        %546 = vmatprep.subr.mxu0 0.0
        %547 = vmatpush1.msra.mxu0 0.0
        %548 = vmatprep.subr.mxu0 0.0
        %549 = vmatpush1.msra.mxu0 0.0
        %550 = vmatprep.subr.mxu0 0.0
        %551 = vmatpush1.msra.mxu0 0.0
        %552 = vmatprep.subr.mxu0 0.0
        %553 = vmatpush1.msra.mxu0 0.0
        %554 = vmatprep.subr.mxu0 0.0
        %555 = vmatpush1.msra.mxu0 0.0
        %556 = vmatprep.subr.mxu0 0.0
        %557 = vmatpush1.msra.mxu0 0.0
        %558 = vmatprep.subr.mxu0 0.0
        %559 = vmatpush1.msra.mxu0 0.0
        %560 = vmatprep.subr.mxu0 0.0
        %561 = vmatpush1.msra.mxu0 0.0
        %562 = vmatprep.subr.mxu0 0.0
        %563 = vmatpush1.msra.mxu0 0.0
        %564 = vmatprep.subr.mxu0 0.0
        %565 = vmatpush1.msra.mxu0 0.0
        %566 = vmatprep.subr.mxu0 0.0
        %567 = vmatpush1.msra.mxu0 0.0
        %568 = vmatprep.subr.mxu0 0.0
        %569 = vmatpush1.msra.mxu0 0.0
        %570 = vmatprep.subr.mxu0 0.0
        %571 = vmatpush1.msra.mxu0 0.0
        %572 = vmatprep.subr.mxu0 0.0
        %573 = vmatpush1.msra.mxu0 0.0
        %574 = vmatprep.subr.mxu0 0.0
        %575 = vmatpush1.msra.mxu0 0.0
        %576 = vmatprep.subr.mxu0 0.0
        %577 = vmatpush1.msra.mxu0 0.0
        %578 = vmatprep.subr.mxu0 0.0
        %579 = vmatpush1.msra.mxu0 0.0
        %580 = vmatprep.subr.mxu0 0.0
        %581 = vmatpush1.msra.mxu0 0.0
        %582 = vmatprep.subr.mxu0 0.0
        %583 = vmatpush1.msra.mxu0 0.0
        %584 = vmatprep.subr.mxu0 0.0
        %585 = vmatpush1.msra.mxu0 0.0
        %586 = vmatprep.subr.mxu0 0.0
        %587 = vmatpush1.msra.mxu0 0.0
        %588 = vmatprep.mubr.f32.mxu0 0.0
        %v589 = vand.u32 %v228, 4294901760
        %590 = vmatmul.mubr.f32.gmra.mrb[0].mxu0 %v589
        %v591 = vpop.f32.mrb[0].mxu0
        %v592 = vadd.f32 %v351, %v591
        %v593 = vpop.f32.mrb[0].mxu0
        %594 = vmatprep.mubr.f32.mxu0 0.0
        %v595 = vand.u32 %v231, 4294901760
        %596 = vmatmul.mubr.f32.gmra.mrb[0].mxu0 %v595
        %v597 = vpop.f32.mrb[0].mxu0
        %v598 = vadd.f32 %v361, %v597
        %v599 = vpop.f32.mrb[0].mxu0
        %600 = vmatprep.mubr.f32.mxu0 0.0
        %v601 = vand.u32 %v234, 4294901760
        %602 = vmatmul.mubr.f32.gmra.mrb[0].mxu0 %v601
        %v603 = vpop.f32.mrb[0].mxu0
        %v604 = vadd.f32 %v371, %v603
        %v605 = vpop.f32.mrb[0].mxu0
        %606 = vmatprep.mubr.f32.mxu0 0.0
        %v607 = vand.u32 %v237, 4294901760
        %608 = vmatmul.mubr.f32.gmra.mrb[0].mxu0 %v607
        %v609 = vpop.f32.mrb[0].mxu0
        %v610 = vadd.f32 %v381, %v609
        %v611 = vpop.f32.mrb[0].mxu0
        %612 = vmatprep.mubr.f32.mxu0 0.0
        %v613 = vand.u32 %v240, 4294901760
        %614 = vmatmul.mubr.f32.gmra.mrb[0].mxu0 %v613
        %v615 = vpop.f32.mrb[0].mxu0
        %v616 = vadd.f32 %v391, %v615
        %v617 = vpop.f32.mrb[0].mxu0
        %618 = vmatprep.mubr.f32.mxu0 0.0
        %v619 = vand.u32 %v243, 4294901760
        %620 = vmatmul.mubr.f32.gmra.mrb[0].mxu0 %v619
        %v621 = vpop.f32.mrb[0].mxu0
        %v622 = vadd.f32 %v401, %v621
        %v623 = vpop.f32.mrb[0].mxu0
        %624 = vmatprep.mubr.f32.mxu0 0.0
        %v625 = vand.u32 %v246, 4294901760
        %626 = vmatmul.mubr.f32.gmra.mrb[0].mxu0 %v625
        %v627 = vpop.f32.mrb[0].mxu0
        %v628 = vadd.f32 %v411, %v627
        %v629 = vpop.f32.mrb[0].mxu0
        %630 = vmatprep.mubr.f32.mxu0 0.0
        %v631 = vand.u32 %v249, 4294901760
        %632 = vmatmul.mubr.f32.gmra.mrb[0].mxu0 %v631
        %v633 = vpop.f32.mrb[0].mxu0
        %v634 = vadd.f32 %v421, %v633
        %v635 = vpop.f32.mrb[0].mxu0
        %636 = vmatprep.mubr.f32.mxu0 0.0
        %v637 = vand.u32 %v252, 4294901760
        %638 = vmatmul.mubr.f32.gmra.mrb[0].mxu0 %v637
        %v639 = vpop.f32.mrb[0].mxu0
        %v640 = vadd.f32 %v431, %v639
        %v641 = vpop.f32.mrb[0].mxu0
        %642 = vmatprep.mubr.f32.mxu0 0.0
        %v643 = vand.u32 %v255, 4294901760
        %644 = vmatmul.mubr.f32.gmra.mrb[0].mxu0 %v643
        %v645 = vpop.f32.mrb[0].mxu0
        %v646 = vadd.f32 %v441, %v645
        %v647 = vpop.f32.mrb[0].mxu0
        %648 = vmatprep.mubr.f32.mxu0 0.0
        %v649 = vand.u32 %v258, 4294901760
        %650 = vmatmul.mubr.f32.gmra.mrb[0].mxu0 %v649
        %v651 = vpop.f32.mrb[0].mxu0
        %v652 = vadd.f32 %v451, %v651
        %v653 = vpop.f32.mrb[0].mxu0
        %654 = vmatprep.mubr.f32.mxu0 0.0
        %v655 = vand.u32 %v261, 4294901760
        %656 = vmatmul.mubr.f32.gmra.mrb[0].mxu0 %v655
        %v657 = vpop.f32.mrb[0].mxu0
        %v658 = vadd.f32 %v461, %v657
        %v659 = vpop.f32.mrb[0].mxu0
        %660 = vmatprep.mubr.f32.mxu0 0.0
        %v661 = vand.u32 %v264, 4294901760
        %662 = vmatmul.mubr.f32.gmra.mrb[0].mxu0 %v661
        %v663 = vpop.f32.mrb[0].mxu0
        %v664 = vadd.f32 %v471, %v663
        %v665 = vpop.f32.mrb[0].mxu0
        %666 = vmatprep.mubr.f32.mxu0 0.0
        %v667 = vand.u32 %v267, 4294901760
        %668 = vmatmul.mubr.f32.gmra.mrb[0].mxu0 %v667
        %v669 = vpop.f32.mrb[0].mxu0
        %v670 = vadd.f32 %v481, %v669
        %v671 = vpop.f32.mrb[0].mxu0
        %672 = vmatprep.mubr.f32.mxu0 0.0
        %v673 = vand.u32 %v270, 4294901760
        %674 = vmatmul.mubr.f32.gmra.mrb[0].mxu0 %v673
        %v675 = vpop.f32.mrb[0].mxu0
        %v676 = vadd.f32 %v491, %v675
        %v677 = vpop.f32.mrb[0].mxu0
        %678 = vmatprep.mubr.f32.mxu0 0.0
        %v679 = vand.u32 %v273, 4294901760
        %680 = vmatmul.mubr.f32.gmra.mrb[0].mxu0 %v679
        %v681 = vpop.f32.mrb[0].mxu0
        %v682 = vadd.f32 %v501, %v681
        %v683 = vpop.f32.mrb[0].mxu0
        %684 = vdwg.mxu0
        %685 = vmatprep.subr.mxu0 0.0
        %v686 = vand.u32 %v215, 4294901760
        %v687 = vsub.f32 %v215, %v686
        %688 = vmatpush1.msra.mxu0 %v687
        %689 = vmatprep.subr.mxu0 0.0
        %v690 = vand.u32 %v216, 4294901760
        %v691 = vsub.f32 %v216, %v690
        %692 = vmatpush1.msra.mxu0 %v691
        %693 = vmatprep.subr.mxu0 0.0
        %v694 = vand.u32 %v217, 4294901760
        %v695 = vsub.f32 %v217, %v694
        %696 = vmatpush1.msra.mxu0 %v695
        %697 = vmatprep.subr.mxu0 0.0
        %v698 = vand.u32 %v218, 4294901760
        %v699 = vsub.f32 %v218, %v698
        %700 = vmatpush1.msra.mxu0 %v699
        %701 = vmatprep.subr.mxu0 0.0
        %702 = vmatpush1.msra.mxu0 0.0
        %703 = vmatprep.subr.mxu0 0.0
        %704 = vmatpush1.msra.mxu0 0.0
        %705 = vmatprep.subr.mxu0 0.0
        %706 = vmatpush1.msra.mxu0 0.0
        %707 = vmatprep.subr.mxu0 0.0
        %708 = vmatpush1.msra.mxu0 0.0
        %709 = vmatprep.subr.mxu0 0.0
        %710 = vmatpush1.msra.mxu0 0.0
        %711 = vmatprep.subr.mxu0 0.0
        %712 = vmatpush1.msra.mxu0 0.0
        %713 = vmatprep.subr.mxu0 0.0
        %714 = vmatpush1.msra.mxu0 0.0
        %715 = vmatprep.subr.mxu0 0.0
        %716 = vmatpush1.msra.mxu0 0.0
        %717 = vmatprep.subr.mxu0 0.0
        %718 = vmatpush1.msra.mxu0 0.0
        %719 = vmatprep.subr.mxu0 0.0
        %720 = vmatpush1.msra.mxu0 0.0
        %721 = vmatprep.subr.mxu0 0.0
        %722 = vmatpush1.msra.mxu0 0.0
        %723 = vmatprep.subr.mxu0 0.0
        %724 = vmatpush1.msra.mxu0 0.0
        %725 = vmatprep.subr.mxu0 0.0
        %726 = vmatpush1.msra.mxu0 0.0
        %727 = vmatprep.subr.mxu0 0.0
        %728 = vmatpush1.msra.mxu0 0.0
        %729 = vmatprep.subr.mxu0 0.0
        %730 = vmatpush1.msra.mxu0 0.0
        %731 = vmatprep.subr.mxu0 0.0
        %732 = vmatpush1.msra.mxu0 0.0
        %733 = vmatprep.subr.mxu0 0.0
        %734 = vmatpush1.msra.mxu0 0.0
        %735 = vmatprep.subr.mxu0 0.0
        %736 = vmatpush1.msra.mxu0 0.0
        %737 = vmatprep.subr.mxu0 0.0
        %738 = vmatpush1.msra.mxu0 0.0
        %739 = vmatprep.subr.mxu0 0.0
        %740 = vmatpush1.msra.mxu0 0.0
        %741 = vmatprep.subr.mxu0 0.0
        %742 = vmatpush1.msra.mxu0 0.0
        %743 = vmatprep.subr.mxu0 0.0
        %744 = vmatpush1.msra.mxu0 0.0
        %745 = vmatprep.subr.mxu0 0.0
        %746 = vmatpush1.msra.mxu0 0.0
        %747 = vmatprep.subr.mxu0 0.0
        %748 = vmatpush1.msra.mxu0 0.0
        %749 = vmatprep.subr.mxu0 0.0
        %750 = vmatpush1.msra.mxu0 0.0
        %751 = vmatprep.subr.mxu0 0.0
        %752 = vmatpush1.msra.mxu0 0.0
        %753 = vmatprep.subr.mxu0 0.0
        %754 = vmatpush1.msra.mxu0 0.0
        %755 = vmatprep.subr.mxu0 0.0
        %756 = vmatpush1.msra.mxu0 0.0
        %757 = vmatprep.mubr.f32.mxu0 0.0
        %v758 = vand.u32 %v228, 4294901760
        %v759 = vsub.f32 %v228, %v758
        %760 = vmatmul.mubr.f32.gmra.mrb[0].mxu0 %v759
        %v761 = vpop.f32.mrb[0].mxu0
        %v762 = vadd.f32 %v592, %v761
        %v763 = vpop.f32.mrb[0].mxu0
        %764 = vmatprep.mubr.f32.mxu0 0.0
        %v765 = vand.u32 %v231, 4294901760
        %v766 = vsub.f32 %v231, %v765
        %767 = vmatmul.mubr.f32.gmra.mrb[0].mxu0 %v766
        %v768 = vpop.f32.mrb[0].mxu0
        %v769 = vadd.f32 %v598, %v768
        %v770 = vpop.f32.mrb[0].mxu0
        %771 = vmatprep.mubr.f32.mxu0 0.0
        %v772 = vand.u32 %v234, 4294901760
        %v773 = vsub.f32 %v234, %v772
        %774 = vmatmul.mubr.f32.gmra.mrb[0].mxu0 %v773
        %v775 = vpop.f32.mrb[0].mxu0
        %v776 = vadd.f32 %v604, %v775
        %v777 = vpop.f32.mrb[0].mxu0
        %778 = vmatprep.mubr.f32.mxu0 0.0
        %v779 = vand.u32 %v237, 4294901760
        %v780 = vsub.f32 %v237, %v779
        %781 = vmatmul.mubr.f32.gmra.mrb[0].mxu0 %v780
        %v782 = vpop.f32.mrb[0].mxu0
        %v783 = vadd.f32 %v610, %v782
        %v784 = vpop.f32.mrb[0].mxu0
        %785 = vmatprep.mubr.f32.mxu0 0.0
        %v786 = vand.u32 %v240, 4294901760
        %v787 = vsub.f32 %v240, %v786
        %788 = vmatmul.mubr.f32.gmra.mrb[0].mxu0 %v787
        %v789 = vpop.f32.mrb[0].mxu0
        %v790 = vadd.f32 %v616, %v789
        %v791 = vpop.f32.mrb[0].mxu0
        %792 = vmatprep.mubr.f32.mxu0 0.0
        %v793 = vand.u32 %v243, 4294901760
        %v794 = vsub.f32 %v243, %v793
        %795 = vmatmul.mubr.f32.gmra.mrb[0].mxu0 %v794
        %v796 = vpop.f32.mrb[0].mxu0
        %v797 = vadd.f32 %v622, %v796
        %v798 = vpop.f32.mrb[0].mxu0
        %799 = vmatprep.mubr.f32.mxu0 0.0
        %v800 = vand.u32 %v246, 4294901760
        %v801 = vsub.f32 %v246, %v800
        %802 = vmatmul.mubr.f32.gmra.mrb[0].mxu0 %v801
        %v803 = vpop.f32.mrb[0].mxu0
        %v804 = vadd.f32 %v628, %v803
        %v805 = vpop.f32.mrb[0].mxu0
        %806 = vmatprep.mubr.f32.mxu0 0.0
        %v807 = vand.u32 %v249, 4294901760
        %v808 = vsub.f32 %v249, %v807
        %809 = vmatmul.mubr.f32.gmra.mrb[0].mxu0 %v808
        %v810 = vpop.f32.mrb[0].mxu0
        %v811 = vadd.f32 %v634, %v810
        %v812 = vpop.f32.mrb[0].mxu0
        %813 = vmatprep.mubr.f32.mxu0 0.0
        %v814 = vand.u32 %v252, 4294901760
        %v815 = vsub.f32 %v252, %v814
        %816 = vmatmul.mubr.f32.gmra.mrb[0].mxu0 %v815
        %v817 = vpop.f32.mrb[0].mxu0
        %v818 = vadd.f32 %v640, %v817
        %v819 = vpop.f32.mrb[0].mxu0
        %820 = vmatprep.mubr.f32.mxu0 0.0
        %v821 = vand.u32 %v255, 4294901760
        %v822 = vsub.f32 %v255, %v821
        %823 = vmatmul.mubr.f32.gmra.mrb[0].mxu0 %v822
        %v824 = vpop.f32.mrb[0].mxu0
        %v825 = vadd.f32 %v646, %v824
        %v826 = vpop.f32.mrb[0].mxu0
        %827 = vmatprep.mubr.f32.mxu0 0.0
        %v828 = vand.u32 %v258, 4294901760
        %v829 = vsub.f32 %v258, %v828
        %830 = vmatmul.mubr.f32.gmra.mrb[0].mxu0 %v829
        %v831 = vpop.f32.mrb[0].mxu0
        %v832 = vadd.f32 %v652, %v831
        %v833 = vpop.f32.mrb[0].mxu0
        %834 = vmatprep.mubr.f32.mxu0 0.0
        %v835 = vand.u32 %v261, 4294901760
        %v836 = vsub.f32 %v261, %v835
        %837 = vmatmul.mubr.f32.gmra.mrb[0].mxu0 %v836
        %v838 = vpop.f32.mrb[0].mxu0
        %v839 = vadd.f32 %v658, %v838
        %v840 = vpop.f32.mrb[0].mxu0
        %841 = vmatprep.mubr.f32.mxu0 0.0
        %v842 = vand.u32 %v264, 4294901760
        %v843 = vsub.f32 %v264, %v842
        %844 = vmatmul.mubr.f32.gmra.mrb[0].mxu0 %v843
        %v845 = vpop.f32.mrb[0].mxu0
        %v846 = vadd.f32 %v664, %v845
        %v847 = vpop.f32.mrb[0].mxu0
        %848 = vmatprep.mubr.f32.mxu0 0.0
        %v849 = vand.u32 %v267, 4294901760
        %v850 = vsub.f32 %v267, %v849
        %851 = vmatmul.mubr.f32.gmra.mrb[0].mxu0 %v850
        %v852 = vpop.f32.mrb[0].mxu0
        %v853 = vadd.f32 %v670, %v852
        %v854 = vpop.f32.mrb[0].mxu0
        %855 = vmatprep.mubr.f32.mxu0 0.0
        %v856 = vand.u32 %v270, 4294901760
        %v857 = vsub.f32 %v270, %v856
        %858 = vmatmul.mubr.f32.gmra.mrb[0].mxu0 %v857
        %v859 = vpop.f32.mrb[0].mxu0
        %v860 = vadd.f32 %v676, %v859
        %v861 = vpop.f32.mrb[0].mxu0
        %862 = vmatprep.mubr.f32.mxu0 0.0
        %v863 = vand.u32 %v273, 4294901760
        %v864 = vsub.f32 %v273, %v863
        %865 = vmatmul.mubr.f32.gmra.mrb[0].mxu0 %v864
        %v866 = vpop.f32.mrb[0].mxu0
        %v867 = vadd.f32 %v682, %v866
        %v868 = vpop.f32.mrb[0].mxu0
        %869 = vdwg.mxu0
        %870 = vmatprep.subr.mxu0 0.0
        %v871 = vand.u32 %v215, 4294901760
        %872 = vmatpush1.msra.mxu0 %v871
        %873 = vmatprep.subr.mxu0 0.0
        %v874 = vand.u32 %v216, 4294901760
        %875 = vmatpush1.msra.mxu0 %v874
        %876 = vmatprep.subr.mxu0 0.0
        %v877 = vand.u32 %v217, 4294901760
        %878 = vmatpush1.msra.mxu0 %v877
        %879 = vmatprep.subr.mxu0 0.0
        %v880 = vand.u32 %v218, 4294901760
        %881 = vmatpush1.msra.mxu0 %v880
        %882 = vmatprep.subr.mxu0 0.0
        %883 = vmatpush1.msra.mxu0 0.0
        %884 = vmatprep.subr.mxu0 0.0
        %885 = vmatpush1.msra.mxu0 0.0
        %886 = vmatprep.subr.mxu0 0.0
        %887 = vmatpush1.msra.mxu0 0.0
        %888 = vmatprep.subr.mxu0 0.0
        %889 = vmatpush1.msra.mxu0 0.0
        %890 = vmatprep.subr.mxu0 0.0
        %891 = vmatpush1.msra.mxu0 0.0
        %892 = vmatprep.subr.mxu0 0.0
        %893 = vmatpush1.msra.mxu0 0.0
        %894 = vmatprep.subr.mxu0 0.0
        %895 = vmatpush1.msra.mxu0 0.0
        %896 = vmatprep.subr.mxu0 0.0
        %897 = vmatpush1.msra.mxu0 0.0
        %898 = vmatprep.subr.mxu0 0.0
        %899 = vmatpush1.msra.mxu0 0.0
        %900 = vmatprep.subr.mxu0 0.0
        %901 = vmatpush1.msra.mxu0 0.0
        %902 = vmatprep.subr.mxu0 0.0
        %903 = vmatpush1.msra.mxu0 0.0
        %904 = vmatprep.subr.mxu0 0.0
        %905 = vmatpush1.msra.mxu0 0.0
        %906 = vmatprep.subr.mxu0 0.0
        %907 = vmatpush1.msra.mxu0 0.0
        %908 = vmatprep.subr.mxu0 0.0
        %909 = vmatpush1.msra.mxu0 0.0
        %910 = vmatprep.subr.mxu0 0.0
        %911 = vmatpush1.msra.mxu0 0.0
        %912 = vmatprep.subr.mxu0 0.0
        %913 = vmatpush1.msra.mxu0 0.0
        %914 = vmatprep.subr.mxu0 0.0
        %915 = vmatpush1.msra.mxu0 0.0
        %916 = vmatprep.subr.mxu0 0.0
        %917 = vmatpush1.msra.mxu0 0.0
        %918 = vmatprep.subr.mxu0 0.0
        %919 = vmatpush1.msra.mxu0 0.0
        %920 = vmatprep.subr.mxu0 0.0
        %921 = vmatpush1.msra.mxu0 0.0
        %922 = vmatprep.subr.mxu0 0.0
        %923 = vmatpush1.msra.mxu0 0.0
        %924 = vmatprep.subr.mxu0 0.0
        %925 = vmatpush1.msra.mxu0 0.0
        %926 = vmatprep.subr.mxu0 0.0
        %927 = vmatpush1.msra.mxu0 0.0
        %928 = vmatprep.subr.mxu0 0.0
        %929 = vmatpush1.msra.mxu0 0.0
        %930 = vmatprep.subr.mxu0 0.0
        %931 = vmatpush1.msra.mxu0 0.0
        %932 = vmatprep.subr.mxu0 0.0
        %933 = vmatpush1.msra.mxu0 0.0
        %934 = vmatprep.subr.mxu0 0.0
        %935 = vmatpush1.msra.mxu0 0.0
        %936 = vmatprep.subr.mxu0 0.0
        %937 = vmatpush1.msra.mxu0 0.0
        %938 = vmatprep.mubr.f32.mxu0 0.0
        %v939 = vand.u32 %v228, 4294901760
        %v940 = vsub.f32 %v228, %v939
        %v941 = vand.u32 %v940, 4294901760
        %942 = vmatmul.mubr.f32.gmra.mrb[0].mxu0 %v941
        %v943 = vpop.f32.mrb[0].mxu0
        %v944 = vadd.f32 %v762, %v943
        %v945 = vpop.f32.mrb[0].mxu0
        %946 = vmatprep.mubr.f32.mxu0 0.0
        %v947 = vand.u32 %v231, 4294901760
        %v948 = vsub.f32 %v231, %v947
        %v949 = vand.u32 %v948, 4294901760
        %950 = vmatmul.mubr.f32.gmra.mrb[0].mxu0 %v949
        %v951 = vpop.f32.mrb[0].mxu0
        %v952 = vadd.f32 %v769, %v951
        %v953 = vpop.f32.mrb[0].mxu0
        %954 = vmatprep.mubr.f32.mxu0 0.0
        %v955 = vand.u32 %v234, 4294901760
        %v956 = vsub.f32 %v234, %v955
        %v957 = vand.u32 %v956, 4294901760
        %958 = vmatmul.mubr.f32.gmra.mrb[0].mxu0 %v957
        %v959 = vpop.f32.mrb[0].mxu0
        %v960 = vadd.f32 %v776, %v959
        %v961 = vpop.f32.mrb[0].mxu0
        %962 = vmatprep.mubr.f32.mxu0 0.0
        %v963 = vand.u32 %v237, 4294901760
        %v964 = vsub.f32 %v237, %v963
        %v965 = vand.u32 %v964, 4294901760
        %966 = vmatmul.mubr.f32.gmra.mrb[0].mxu0 %v965
        %v967 = vpop.f32.mrb[0].mxu0
        %v968 = vadd.f32 %v783, %v967
        %v969 = vpop.f32.mrb[0].mxu0
        %970 = vmatprep.mubr.f32.mxu0 0.0
        %v971 = vand.u32 %v240, 4294901760
        %v972 = vsub.f32 %v240, %v971
        %v973 = vand.u32 %v972, 4294901760
        %974 = vmatmul.mubr.f32.gmra.mrb[0].mxu0 %v973
        %v975 = vpop.f32.mrb[0].mxu0
        %v976 = vadd.f32 %v790, %v975
        %v977 = vpop.f32.mrb[0].mxu0
        %978 = vmatprep.mubr.f32.mxu0 0.0
        %v979 = vand.u32 %v243, 4294901760
        %v980 = vsub.f32 %v243, %v979
        %v981 = vand.u32 %v980, 4294901760
        %982 = vmatmul.mubr.f32.gmra.mrb[0].mxu0 %v981
        %v983 = vpop.f32.mrb[0].mxu0
        %v984 = vadd.f32 %v797, %v983
        %v985 = vpop.f32.mrb[0].mxu0
        %986 = vmatprep.mubr.f32.mxu0 0.0
        %v987 = vand.u32 %v246, 4294901760
        %v988 = vsub.f32 %v246, %v987
        %v989 = vand.u32 %v988, 4294901760
        %990 = vmatmul.mubr.f32.gmra.mrb[0].mxu0 %v989
        %v991 = vpop.f32.mrb[0].mxu0
        %v992 = vadd.f32 %v804, %v991
        %v993 = vpop.f32.mrb[0].mxu0
        %994 = vmatprep.mubr.f32.mxu0 0.0
        %v995 = vand.u32 %v249, 4294901760
        %v996 = vsub.f32 %v249, %v995
        %v997 = vand.u32 %v996, 4294901760
        %998 = vmatmul.mubr.f32.gmra.mrb[0].mxu0 %v997
        %v999 = vpop.f32.mrb[0].mxu0
        %v1000 = vadd.f32 %v811, %v999
        %v1001 = vpop.f32.mrb[0].mxu0
        %1002 = vmatprep.mubr.f32.mxu0 0.0
        %v1003 = vand.u32 %v252, 4294901760
        %v1004 = vsub.f32 %v252, %v1003
        %v1005 = vand.u32 %v1004, 4294901760
        %1006 = vmatmul.mubr.f32.gmra.mrb[0].mxu0 %v1005
        %v1007 = vpop.f32.mrb[0].mxu0
        %v1008 = vadd.f32 %v818, %v1007
        %v1009 = vpop.f32.mrb[0].mxu0
        %1010 = vmatprep.mubr.f32.mxu0 0.0
        %v1011 = vand.u32 %v255, 4294901760
        %v1012 = vsub.f32 %v255, %v1011
        %v1013 = vand.u32 %v1012, 4294901760
        %1014 = vmatmul.mubr.f32.gmra.mrb[0].mxu0 %v1013
        %v1015 = vpop.f32.mrb[0].mxu0
        %v1016 = vadd.f32 %v825, %v1015
        %v1017 = vpop.f32.mrb[0].mxu0
        %1018 = vmatprep.mubr.f32.mxu0 0.0
        %v1019 = vand.u32 %v258, 4294901760
        %v1020 = vsub.f32 %v258, %v1019
        %v1021 = vand.u32 %v1020, 4294901760
        %1022 = vmatmul.mubr.f32.gmra.mrb[0].mxu0 %v1021
        %v1023 = vpop.f32.mrb[0].mxu0
        %v1024 = vadd.f32 %v832, %v1023
        %v1025 = vpop.f32.mrb[0].mxu0
        %1026 = vmatprep.mubr.f32.mxu0 0.0
        %v1027 = vand.u32 %v261, 4294901760
        %v1028 = vsub.f32 %v261, %v1027
        %v1029 = vand.u32 %v1028, 4294901760
        %1030 = vmatmul.mubr.f32.gmra.mrb[0].mxu0 %v1029
        %v1031 = vpop.f32.mrb[0].mxu0
        %v1032 = vadd.f32 %v839, %v1031
        %v1033 = vpop.f32.mrb[0].mxu0
        %1034 = vmatprep.mubr.f32.mxu0 0.0
        %v1035 = vand.u32 %v264, 4294901760
        %v1036 = vsub.f32 %v264, %v1035
        %v1037 = vand.u32 %v1036, 4294901760
        %1038 = vmatmul.mubr.f32.gmra.mrb[0].mxu0 %v1037
        %v1039 = vpop.f32.mrb[0].mxu0
        %v1040 = vadd.f32 %v846, %v1039
        %v1041 = vpop.f32.mrb[0].mxu0
        %1042 = vmatprep.mubr.f32.mxu0 0.0
        %v1043 = vand.u32 %v267, 4294901760
        %v1044 = vsub.f32 %v267, %v1043
        %v1045 = vand.u32 %v1044, 4294901760
        %1046 = vmatmul.mubr.f32.gmra.mrb[0].mxu0 %v1045
        %v1047 = vpop.f32.mrb[0].mxu0
        %v1048 = vadd.f32 %v853, %v1047
        %v1049 = vpop.f32.mrb[0].mxu0
        %1050 = vmatprep.mubr.f32.mxu0 0.0
        %v1051 = vand.u32 %v270, 4294901760
        %v1052 = vsub.f32 %v270, %v1051
        %v1053 = vand.u32 %v1052, 4294901760
        %1054 = vmatmul.mubr.f32.gmra.mrb[0].mxu0 %v1053
        %v1055 = vpop.f32.mrb[0].mxu0
        %v1056 = vadd.f32 %v860, %v1055
        %v1057 = vpop.f32.mrb[0].mxu0
        %1058 = vmatprep.mubr.f32.mxu0 0.0
        %v1059 = vand.u32 %v273, 4294901760
        %v1060 = vsub.f32 %v273, %v1059
        %v1061 = vand.u32 %v1060, 4294901760
        %1062 = vmatmul.mubr.f32.gmra.mrb[0].mxu0 %v1061
        %v1063 = vpop.f32.mrb[0].mxu0
        %v1064 = vadd.f32 %v867, %v1063
        %v1065 = vpop.f32.mrb[0].mxu0
        %1066 = vdwg.mxu0
        %1067 = vmatprep.subr.mxu0 0.0
        %v1068 = vand.u32 %v215, 4294901760
        %v1069 = vsub.f32 %v215, %v1068
        %v1070 = vand.u32 %v1069, 4294901760
        %1071 = vmatpush1.msra.mxu0 %v1070
        %1072 = vmatprep.subr.mxu0 0.0
        %v1073 = vand.u32 %v216, 4294901760
        %v1074 = vsub.f32 %v216, %v1073
        %v1075 = vand.u32 %v1074, 4294901760
        %1076 = vmatpush1.msra.mxu0 %v1075
        %1077 = vmatprep.subr.mxu0 0.0
        %v1078 = vand.u32 %v217, 4294901760
        %v1079 = vsub.f32 %v217, %v1078
        %v1080 = vand.u32 %v1079, 4294901760
        %1081 = vmatpush1.msra.mxu0 %v1080
        %1082 = vmatprep.subr.mxu0 0.0
        %v1083 = vand.u32 %v218, 4294901760
        %v1084 = vsub.f32 %v218, %v1083
        %v1085 = vand.u32 %v1084, 4294901760
        %1086 = vmatpush1.msra.mxu0 %v1085
        %1087 = vmatprep.subr.mxu0 0.0
        %1088 = vmatpush1.msra.mxu0 0.0
        %1089 = vmatprep.subr.mxu0 0.0
        %1090 = vmatpush1.msra.mxu0 0.0
        %1091 = vmatprep.subr.mxu0 0.0
        %1092 = vmatpush1.msra.mxu0 0.0
        %1093 = vmatprep.subr.mxu0 0.0
        %1094 = vmatpush1.msra.mxu0 0.0
        %1095 = vmatprep.subr.mxu0 0.0
        %1096 = vmatpush1.msra.mxu0 0.0
        %1097 = vmatprep.subr.mxu0 0.0
        %1098 = vmatpush1.msra.mxu0 0.0
        %1099 = vmatprep.subr.mxu0 0.0
        %1100 = vmatpush1.msra.mxu0 0.0
        %1101 = vmatprep.subr.mxu0 0.0
        %1102 = vmatpush1.msra.mxu0 0.0
        %1103 = vmatprep.subr.mxu0 0.0
        %1104 = vmatpush1.msra.mxu0 0.0
        %1105 = vmatprep.subr.mxu0 0.0
        %1106 = vmatpush1.msra.mxu0 0.0
        %1107 = vmatprep.subr.mxu0 0.0
        %1108 = vmatpush1.msra.mxu0 0.0
        %1109 = vmatprep.subr.mxu0 0.0
        %1110 = vmatpush1.msra.mxu0 0.0
        %1111 = vmatprep.subr.mxu0 0.0
        %1112 = vmatpush1.msra.mxu0 0.0
        %1113 = vmatprep.subr.mxu0 0.0
        %1114 = vmatpush1.msra.mxu0 0.0
        %1115 = vmatprep.subr.mxu0 0.0
        %1116 = vmatpush1.msra.mxu0 0.0
        %1117 = vmatprep.subr.mxu0 0.0
        %1118 = vmatpush1.msra.mxu0 0.0
        %1119 = vmatprep.subr.mxu0 0.0
        %1120 = vmatpush1.msra.mxu0 0.0
        %1121 = vmatprep.subr.mxu0 0.0
        %1122 = vmatpush1.msra.mxu0 0.0
        %1123 = vmatprep.subr.mxu0 0.0
        %1124 = vmatpush1.msra.mxu0 0.0
        %1125 = vmatprep.subr.mxu0 0.0
        %1126 = vmatpush1.msra.mxu0 0.0
        %1127 = vmatprep.subr.mxu0 0.0
        %1128 = vmatpush1.msra.mxu0 0.0
        %1129 = vmatprep.subr.mxu0 0.0
        %1130 = vmatpush1.msra.mxu0 0.0
        %1131 = vmatprep.subr.mxu0 0.0
        %1132 = vmatpush1.msra.mxu0 0.0
        %1133 = vmatprep.subr.mxu0 0.0
        %1134 = vmatpush1.msra.mxu0 0.0
        %1135 = vmatprep.subr.mxu0 0.0
        %1136 = vmatpush1.msra.mxu0 0.0
        %1137 = vmatprep.subr.mxu0 0.0
        %1138 = vmatpush1.msra.mxu0 0.0
        %1139 = vmatprep.subr.mxu0 0.0
        %1140 = vmatpush1.msra.mxu0 0.0
        %1141 = vmatprep.subr.mxu0 0.0
        %1142 = vmatpush1.msra.mxu0 0.0
        %1143 = vmatprep.mubr.f32.mxu0 0.0
        %v1144 = vand.u32 %v228, 4294901760
        %1145 = vmatmul.mubr.f32.gmra.mrb[0].mxu0 %v1144
        %v1146 = vpop.f32.mrb[0].mxu0
        %v1147 = vadd.f32 %v944, %v1146
        %v1148 = vpop.f32.mrb[0].mxu0
        %1149 = vmatprep.mubr.f32.mxu0 0.0
        %v1150 = vand.u32 %v231, 4294901760
        %1151 = vmatmul.mubr.f32.gmra.mrb[0].mxu0 %v1150
        %v1152 = vpop.f32.mrb[0].mxu0
        %v1153 = vadd.f32 %v952, %v1152
        %v1154 = vpop.f32.mrb[0].mxu0
        %1155 = vmatprep.mubr.f32.mxu0 0.0
        %v1156 = vand.u32 %v234, 4294901760
        %1157 = vmatmul.mubr.f32.gmra.mrb[0].mxu0 %v1156
        %v1158 = vpop.f32.mrb[0].mxu0
        %v1159 = vadd.f32 %v960, %v1158
        %v1160 = vpop.f32.mrb[0].mxu0
        %1161 = vmatprep.mubr.f32.mxu0 0.0
        %v1162 = vand.u32 %v237, 4294901760
        %1163 = vmatmul.mubr.f32.gmra.mrb[0].mxu0 %v1162
        %v1164 = vpop.f32.mrb[0].mxu0
        %v1165 = vadd.f32 %v968, %v1164
        %v1166 = vpop.f32.mrb[0].mxu0
        %1167 = vmatprep.mubr.f32.mxu0 0.0
        %v1168 = vand.u32 %v240, 4294901760
        %1169 = vmatmul.mubr.f32.gmra.mrb[0].mxu0 %v1168
        %v1170 = vpop.f32.mrb[0].mxu0
        %v1171 = vadd.f32 %v976, %v1170
        %v1172 = vpop.f32.mrb[0].mxu0
        %1173 = vmatprep.mubr.f32.mxu0 0.0
        %v1174 = vand.u32 %v243, 4294901760
        %1175 = vmatmul.mubr.f32.gmra.mrb[0].mxu0 %v1174
        %v1176 = vpop.f32.mrb[0].mxu0
        %v1177 = vadd.f32 %v984, %v1176
        %v1178 = vpop.f32.mrb[0].mxu0
        %1179 = vmatprep.mubr.f32.mxu0 0.0
        %v1180 = vand.u32 %v246, 4294901760
        %1181 = vmatmul.mubr.f32.gmra.mrb[0].mxu0 %v1180
        %v1182 = vpop.f32.mrb[0].mxu0
        %v1183 = vadd.f32 %v992, %v1182
        %v1184 = vpop.f32.mrb[0].mxu0
        %1185 = vmatprep.mubr.f32.mxu0 0.0
        %v1186 = vand.u32 %v249, 4294901760
        %1187 = vmatmul.mubr.f32.gmra.mrb[0].mxu0 %v1186
        %v1188 = vpop.f32.mrb[0].mxu0
        %v1189 = vadd.f32 %v1000, %v1188
        %v1190 = vpop.f32.mrb[0].mxu0
        %1191 = vmatprep.mubr.f32.mxu0 0.0
        %v1192 = vand.u32 %v252, 4294901760
        %1193 = vmatmul.mubr.f32.gmra.mrb[0].mxu0 %v1192
        %v1194 = vpop.f32.mrb[0].mxu0
        %v1195 = vadd.f32 %v1008, %v1194
        %v1196 = vpop.f32.mrb[0].mxu0
        %1197 = vmatprep.mubr.f32.mxu0 0.0
        %v1198 = vand.u32 %v255, 4294901760
        %1199 = vmatmul.mubr.f32.gmra.mrb[0].mxu0 %v1198
        %v1200 = vpop.f32.mrb[0].mxu0
        %v1201 = vadd.f32 %v1016, %v1200
        %v1202 = vpop.f32.mrb[0].mxu0
        %1203 = vmatprep.mubr.f32.mxu0 0.0
        %v1204 = vand.u32 %v258, 4294901760
        %1205 = vmatmul.mubr.f32.gmra.mrb[0].mxu0 %v1204
        %v1206 = vpop.f32.mrb[0].mxu0
        %v1207 = vadd.f32 %v1024, %v1206
        %v1208 = vpop.f32.mrb[0].mxu0
        %1209 = vmatprep.mubr.f32.mxu0 0.0
        %v1210 = vand.u32 %v261, 4294901760
        %1211 = vmatmul.mubr.f32.gmra.mrb[0].mxu0 %v1210
        %v1212 = vpop.f32.mrb[0].mxu0
        %v1213 = vadd.f32 %v1032, %v1212
        %v1214 = vpop.f32.mrb[0].mxu0
        %1215 = vmatprep.mubr.f32.mxu0 0.0
        %v1216 = vand.u32 %v264, 4294901760
        %1217 = vmatmul.mubr.f32.gmra.mrb[0].mxu0 %v1216
        %v1218 = vpop.f32.mrb[0].mxu0
        %v1219 = vadd.f32 %v1040, %v1218
        %v1220 = vpop.f32.mrb[0].mxu0
        %1221 = vmatprep.mubr.f32.mxu0 0.0
        %v1222 = vand.u32 %v267, 4294901760
        %1223 = vmatmul.mubr.f32.gmra.mrb[0].mxu0 %v1222
        %v1224 = vpop.f32.mrb[0].mxu0
        %v1225 = vadd.f32 %v1048, %v1224
        %v1226 = vpop.f32.mrb[0].mxu0
        %1227 = vmatprep.mubr.f32.mxu0 0.0
        %v1228 = vand.u32 %v270, 4294901760
        %1229 = vmatmul.mubr.f32.gmra.mrb[0].mxu0 %v1228
        %v1230 = vpop.f32.mrb[0].mxu0
        %v1231 = vadd.f32 %v1056, %v1230
        %v1232 = vpop.f32.mrb[0].mxu0
        %1233 = vmatprep.mubr.f32.mxu0 0.0
        %v1234 = vand.u32 %v273, 4294901760
        %1235 = vmatmul.mubr.f32.gmra.mrb[0].mxu0 %v1234
        %v1236 = vpop.f32.mrb[0].mxu0
        %v1237 = vadd.f32 %v1064, %v1236
        %v1238 = vpop.f32.mrb[0].mxu0
        %1239 = vdwg.mxu0
        %1240 = vmatprep.subr.mxu0 0.0
        %v1241 = vand.u32 %v215, 4294901760
        %1242 = vmatpush1.msra.mxu0 %v1241
        %1243 = vmatprep.subr.mxu0 0.0
        %v1244 = vand.u32 %v216, 4294901760
        %1245 = vmatpush1.msra.mxu0 %v1244
        %1246 = vmatprep.subr.mxu0 0.0
        %v1247 = vand.u32 %v217, 4294901760
        %1248 = vmatpush1.msra.mxu0 %v1247
        %1249 = vmatprep.subr.mxu0 0.0
        %v1250 = vand.u32 %v218, 4294901760
        %1251 = vmatpush1.msra.mxu0 %v1250
        %1252 = vmatprep.subr.mxu0 0.0
        %1253 = vmatpush1.msra.mxu0 0.0
        %1254 = vmatprep.subr.mxu0 0.0
        %1255 = vmatpush1.msra.mxu0 0.0
        %1256 = vmatprep.subr.mxu0 0.0
        %1257 = vmatpush1.msra.mxu0 0.0
        %1258 = vmatprep.subr.mxu0 0.0
        %1259 = vmatpush1.msra.mxu0 0.0
        %1260 = vmatprep.subr.mxu0 0.0
        %1261 = vmatpush1.msra.mxu0 0.0
        %1262 = vmatprep.subr.mxu0 0.0
        %1263 = vmatpush1.msra.mxu0 0.0
        %1264 = vmatprep.subr.mxu0 0.0
        %1265 = vmatpush1.msra.mxu0 0.0
        %1266 = vmatprep.subr.mxu0 0.0
        %1267 = vmatpush1.msra.mxu0 0.0
        %1268 = vmatprep.subr.mxu0 0.0
        %1269 = vmatpush1.msra.mxu0 0.0
        %1270 = vmatprep.subr.mxu0 0.0
        %1271 = vmatpush1.msra.mxu0 0.0
        %1272 = vmatprep.subr.mxu0 0.0
        %1273 = vmatpush1.msra.mxu0 0.0
        %1274 = vmatprep.subr.mxu0 0.0
        %1275 = vmatpush1.msra.mxu0 0.0
        %1276 = vmatprep.subr.mxu0 0.0
        %1277 = vmatpush1.msra.mxu0 0.0
        %1278 = vmatprep.subr.mxu0 0.0
        %1279 = vmatpush1.msra.mxu0 0.0
        %1280 = vmatprep.subr.mxu0 0.0
        %1281 = vmatpush1.msra.mxu0 0.0
        %1282 = vmatprep.subr.mxu0 0.0
        %1283 = vmatpush1.msra.mxu0 0.0
        %1284 = vmatprep.subr.mxu0 0.0
        %1285 = vmatpush1.msra.mxu0 0.0
        %1286 = vmatprep.subr.mxu0 0.0
        %1287 = vmatpush1.msra.mxu0 0.0
        %1288 = vmatprep.subr.mxu0 0.0
        %1289 = vmatpush1.msra.mxu0 0.0
        %1290 = vmatprep.subr.mxu0 0.0
        %1291 = vmatpush1.msra.mxu0 0.0
        %1292 = vmatprep.subr.mxu0 0.0
        %1293 = vmatpush1.msra.mxu0 0.0
        %1294 = vmatprep.subr.mxu0 0.0
        %1295 = vmatpush1.msra.mxu0 0.0
        %1296 = vmatprep.subr.mxu0 0.0
        %1297 = vmatpush1.msra.mxu0 0.0
        %1298 = vmatprep.subr.mxu0 0.0
        %1299 = vmatpush1.msra.mxu0 0.0
        %1300 = vmatprep.subr.mxu0 0.0
        %1301 = vmatpush1.msra.mxu0 0.0
        %1302 = vmatprep.subr.mxu0 0.0
        %1303 = vmatpush1.msra.mxu0 0.0
        %1304 = vmatprep.subr.mxu0 0.0
        %1305 = vmatpush1.msra.mxu0 0.0
        %1306 = vmatprep.subr.mxu0 0.0
        %1307 = vmatpush1.msra.mxu0 0.0
        %1308 = vmatprep.mubr.f32.mxu0 0.0
        %v1309 = vand.u32 %v228, 4294901760
        %1310 = vmatmul.mubr.f32.gmra.mrb[0].mxu0 %v1309
        %v1311 = vpop.f32.mrb[0].mxu0
        %v1312 = vadd.f32 %v1147, %v1311
        %v1313 = vpop.f32.mrb[0].mxu0
        %1314 = vmatprep.mubr.f32.mxu0 0.0
        %v1315 = vand.u32 %v231, 4294901760
        %1316 = vmatmul.mubr.f32.gmra.mrb[0].mxu0 %v1315
        %v1317 = vpop.f32.mrb[0].mxu0
        %v1318 = vadd.f32 %v1153, %v1317
        %v1319 = vpop.f32.mrb[0].mxu0
        %1320 = vmatprep.mubr.f32.mxu0 0.0
        %v1321 = vand.u32 %v234, 4294901760
        %1322 = vmatmul.mubr.f32.gmra.mrb[0].mxu0 %v1321
        %v1323 = vpop.f32.mrb[0].mxu0
        %v1324 = vadd.f32 %v1159, %v1323
        %v1325 = vpop.f32.mrb[0].mxu0
        %1326 = vmatprep.mubr.f32.mxu0 0.0
        %v1327 = vand.u32 %v237, 4294901760
        %1328 = vmatmul.mubr.f32.gmra.mrb[0].mxu0 %v1327
        %v1329 = vpop.f32.mrb[0].mxu0
        %v1330 = vadd.f32 %v1165, %v1329
        %v1331 = vpop.f32.mrb[0].mxu0
        %1332 = vmatprep.mubr.f32.mxu0 0.0
        %v1333 = vand.u32 %v240, 4294901760
        %1334 = vmatmul.mubr.f32.gmra.mrb[0].mxu0 %v1333
        %v1335 = vpop.f32.mrb[0].mxu0
        %v1336 = vadd.f32 %v1171, %v1335
        %v1337 = vpop.f32.mrb[0].mxu0
        %1338 = vmatprep.mubr.f32.mxu0 0.0
        %v1339 = vand.u32 %v243, 4294901760
        %1340 = vmatmul.mubr.f32.gmra.mrb[0].mxu0 %v1339
        %v1341 = vpop.f32.mrb[0].mxu0
        %v1342 = vadd.f32 %v1177, %v1341
        %v1343 = vpop.f32.mrb[0].mxu0
        %1344 = vmatprep.mubr.f32.mxu0 0.0
        %v1345 = vand.u32 %v246, 4294901760
        %1346 = vmatmul.mubr.f32.gmra.mrb[0].mxu0 %v1345
        %v1347 = vpop.f32.mrb[0].mxu0
        %v1348 = vadd.f32 %v1183, %v1347
        %v1349 = vpop.f32.mrb[0].mxu0
        %1350 = vmatprep.mubr.f32.mxu0 0.0
        %v1351 = vand.u32 %v249, 4294901760
        %1352 = vmatmul.mubr.f32.gmra.mrb[0].mxu0 %v1351
        %v1353 = vpop.f32.mrb[0].mxu0
        %v1354 = vadd.f32 %v1189, %v1353
        %v1355 = vpop.f32.mrb[0].mxu0
        %1356 = vmatprep.mubr.f32.mxu0 0.0
        %v1357 = vand.u32 %v252, 4294901760
        %1358 = vmatmul.mubr.f32.gmra.mrb[0].mxu0 %v1357
        %v1359 = vpop.f32.mrb[0].mxu0
        %v1360 = vadd.f32 %v1195, %v1359
        %v1361 = vpop.f32.mrb[0].mxu0
        %1362 = vmatprep.mubr.f32.mxu0 0.0
        %v1363 = vand.u32 %v255, 4294901760
        %1364 = vmatmul.mubr.f32.gmra.mrb[0].mxu0 %v1363
        %v1365 = vpop.f32.mrb[0].mxu0
        %v1366 = vadd.f32 %v1201, %v1365
        %v1367 = vpop.f32.mrb[0].mxu0
        %1368 = vmatprep.mubr.f32.mxu0 0.0
        %v1369 = vand.u32 %v258, 4294901760
        %1370 = vmatmul.mubr.f32.gmra.mrb[0].mxu0 %v1369
        %v1371 = vpop.f32.mrb[0].mxu0
        %v1372 = vadd.f32 %v1207, %v1371
        %v1373 = vpop.f32.mrb[0].mxu0
        %1374 = vmatprep.mubr.f32.mxu0 0.0
        %v1375 = vand.u32 %v261, 4294901760
        %1376 = vmatmul.mubr.f32.gmra.mrb[0].mxu0 %v1375
        %v1377 = vpop.f32.mrb[0].mxu0
        %v1378 = vadd.f32 %v1213, %v1377
        %v1379 = vpop.f32.mrb[0].mxu0
        %1380 = vmatprep.mubr.f32.mxu0 0.0
        %v1381 = vand.u32 %v264, 4294901760
        %1382 = vmatmul.mubr.f32.gmra.mrb[0].mxu0 %v1381
        %v1383 = vpop.f32.mrb[0].mxu0
        %v1384 = vadd.f32 %v1219, %v1383
        %v1385 = vpop.f32.mrb[0].mxu0
        %1386 = vmatprep.mubr.f32.mxu0 0.0
        %v1387 = vand.u32 %v267, 4294901760
        %1388 = vmatmul.mubr.f32.gmra.mrb[0].mxu0 %v1387
        %v1389 = vpop.f32.mrb[0].mxu0
        %v1390 = vadd.f32 %v1225, %v1389
        %v1391 = vpop.f32.mrb[0].mxu0
        %1392 = vmatprep.mubr.f32.mxu0 0.0
        %v1393 = vand.u32 %v270, 4294901760
        %1394 = vmatmul.mubr.f32.gmra.mrb[0].mxu0 %v1393
        %v1395 = vpop.f32.mrb[0].mxu0
        %v1396 = vadd.f32 %v1231, %v1395
        %v1397 = vpop.f32.mrb[0].mxu0
        %1398 = vmatprep.mubr.f32.mxu0 0.0
        %v1399 = vand.u32 %v273, 4294901760
        %1400 = vmatmul.mubr.f32.gmra.mrb[0].mxu0 %v1399
        %v1401 = vpop.f32.mrb[0].mxu0
        %v1402 = vadd.f32 %v1237, %v1401
        %v1403 = vpop.f32.mrb[0].mxu0
        %1404 = vdwg.mxu0
        %1405 = vmax.xlane.f32.xlu0 %v1312
        %v1406 = vpop.xlane.xlu0 %1405
        %1407 = vmax.xlane.f32.xlu0 %v1318
        %v1408 = vpop.xlane.xlu0 %1407
        %1409 = vmax.xlane.f32.xlu0 %v1324
        %v1410 = vpop.xlane.xlu0 %1409
        %1411 = vmax.xlane.f32.xlu0 %v1330
        %v1412 = vpop.xlane.xlu0 %1411
        %1413 = vmax.xlane.f32.xlu0 %v1336
        %v1414 = vpop.xlane.xlu0 %1413
        %1415 = vmax.xlane.f32.xlu0 %v1342
        %v1416 = vpop.xlane.xlu0 %1415
        %1417 = vmax.xlane.f32.xlu0 %v1348
        %v1418 = vpop.xlane.xlu0 %1417
        %1419 = vmax.xlane.f32.xlu0 %v1354
        %v1420 = vpop.xlane.xlu0 %1419
        %1421 = vmax.xlane.f32.xlu0 %v1360
        %v1422 = vpop.xlane.xlu0 %1421
        %1423 = vmax.xlane.f32.xlu0 %v1366
        %v1424 = vpop.xlane.xlu0 %1423
        %1425 = vmax.xlane.f32.xlu0 %v1372
        %v1426 = vpop.xlane.xlu0 %1425
        %1427 = vmax.xlane.f32.xlu0 %v1378
        %v1428 = vpop.xlane.xlu0 %1427
        %1429 = vmax.xlane.f32.xlu0 %v1384
        %v1430 = vpop.xlane.xlu0 %1429
        %1431 = vmax.xlane.f32.xlu0 %v1390
        %v1432 = vpop.xlane.xlu0 %1431
        %1433 = vmax.xlane.f32.xlu0 %v1396
        %v1434 = vpop.xlane.xlu0 %1433
        %1435 = vmax.xlane.f32.xlu0 %v1402
        %v1436 = vpop.xlane.xlu0 %1435
        %v1437 = vlaneseq
        %v1438 = vand.u32 %v1437, 127
        %vm1439 = vcmp.eq.f32.partialorder %v1312, %v1406
        %vm1440 = vcmp.eq.f32.partialorder %v1318, %v1408
        %vm1441 = vcmp.eq.f32.partialorder %v1324, %v1410
        %vm1442 = vcmp.eq.f32.partialorder %v1330, %v1412
        %vm1443 = vcmp.eq.f32.partialorder %v1336, %v1414
        %vm1444 = vcmp.eq.f32.partialorder %v1342, %v1416
        %vm1445 = vcmp.eq.f32.partialorder %v1348, %v1418
        %vm1446 = vcmp.eq.f32.partialorder %v1354, %v1420
        %vm1447 = vcmp.eq.f32.partialorder %v1360, %v1422
        %vm1448 = vcmp.eq.f32.partialorder %v1366, %v1424
        %vm1449 = vcmp.eq.f32.partialorder %v1372, %v1426
        %vm1450 = vcmp.eq.f32.partialorder %v1378, %v1428
        %vm1451 = vcmp.eq.f32.partialorder %v1384, %v1430
        %vm1452 = vcmp.eq.f32.partialorder %v1390, %v1432
        %vm1453 = vcmp.eq.f32.partialorder %v1396, %v1434
        %vm1454 = vcmp.eq.f32.partialorder %v1402, %v1436
        %v1455 = vsel %vm1439, %v1438, 128
        %v1456 = vsel %vm1440, %v1438, 128
        %v1457 = vsel %vm1441, %v1438, 128
        %v1458 = vsel %vm1442, %v1438, 128
        %v1459 = vsel %vm1443, %v1438, 128
        %v1460 = vsel %vm1444, %v1438, 128
        %v1461 = vsel %vm1445, %v1438, 128
        %v1462 = vsel %vm1446, %v1438, 128
        %v1463 = vsel %vm1447, %v1438, 128
        %v1464 = vsel %vm1448, %v1438, 128
        %v1465 = vsel %vm1449, %v1438, 128
        %v1466 = vsel %vm1450, %v1438, 128
        %v1467 = vsel %vm1451, %v1438, 128
        %v1468 = vsel %vm1452, %v1438, 128
        %v1469 = vsel %vm1453, %v1438, 128
        %v1470 = vsel %vm1454, %v1438, 128
        %v1471 = vand.u32 %v1455, 65535
        %v1472 = vshra.s32 %v1455, 16
        %v1473 = vcvt.s32.f32 %v1471
        %v1474 = vcvt.s32.f32 %v1472
        %1475 = vmin.xlane.f32.xlu0 %v1474
        %v1476 = vpop.xlane.xlu0 %1475
        %vm1477 = vcmp.eq.f32.partialorder %v1474, %v1476
        %v1478 = vsel %vm1477, %v1473, inf
        %1479 = vmin.xlane.f32.xlu0 %v1478
        %v1480 = vpop.xlane.xlu0 %1479
        %v1481 = vcvt.f32.s32 %v1480
        %v1482 = vcvt.f32.s32 %v1476
        %v1483 = vshll.u32 %v1482, 16
        %v1484 = vadd.s32 %v1483, %v1481
        %v1485 = vand.u32 %v1456, 65535
        %v1486 = vshra.s32 %v1456, 16
        %v1487 = vcvt.s32.f32 %v1485
        %v1488 = vcvt.s32.f32 %v1486
        %1489 = vmin.xlane.f32.xlu0 %v1488
        %v1490 = vpop.xlane.xlu0 %1489
        %vm1491 = vcmp.eq.f32.partialorder %v1488, %v1490
        %v1492 = vsel %vm1491, %v1487, inf
        %1493 = vmin.xlane.f32.xlu0 %v1492
        %v1494 = vpop.xlane.xlu0 %1493
        %v1495 = vcvt.f32.s32 %v1494
        %v1496 = vcvt.f32.s32 %v1490
        %v1497 = vshll.u32 %v1496, 16
        %v1498 = vadd.s32 %v1497, %v1495
        %v1499 = vand.u32 %v1457, 65535
        %v1500 = vshra.s32 %v1457, 16
        %v1501 = vcvt.s32.f32 %v1499
        %v1502 = vcvt.s32.f32 %v1500
        %1503 = vmin.xlane.f32.xlu0 %v1502
        %v1504 = vpop.xlane.xlu0 %1503
        %vm1505 = vcmp.eq.f32.partialorder %v1502, %v1504
        %v1506 = vsel %vm1505, %v1501, inf
        %1507 = vmin.xlane.f32.xlu0 %v1506
        %v1508 = vpop.xlane.xlu0 %1507
        %v1509 = vcvt.f32.s32 %v1508
        %v1510 = vcvt.f32.s32 %v1504
        %v1511 = vshll.u32 %v1510, 16
        %v1512 = vadd.s32 %v1511, %v1509
        %v1513 = vand.u32 %v1458, 65535
        %v1514 = vshra.s32 %v1458, 16
        %v1515 = vcvt.s32.f32 %v1513
        %v1516 = vcvt.s32.f32 %v1514
        %1517 = vmin.xlane.f32.xlu0 %v1516
        %v1518 = vpop.xlane.xlu0 %1517
        %vm1519 = vcmp.eq.f32.partialorder %v1516, %v1518
        %v1520 = vsel %vm1519, %v1515, inf
        %1521 = vmin.xlane.f32.xlu0 %v1520
        %v1522 = vpop.xlane.xlu0 %1521
        %v1523 = vcvt.f32.s32 %v1522
        %v1524 = vcvt.f32.s32 %v1518
        %v1525 = vshll.u32 %v1524, 16
        %v1526 = vadd.s32 %v1525, %v1523
        %v1527 = vand.u32 %v1459, 65535
        %v1528 = vshra.s32 %v1459, 16
        %v1529 = vcvt.s32.f32 %v1527
        %v1530 = vcvt.s32.f32 %v1528
        %1531 = vmin.xlane.f32.xlu0 %v1530
        %v1532 = vpop.xlane.xlu0 %1531
        %vm1533 = vcmp.eq.f32.partialorder %v1530, %v1532
        %v1534 = vsel %vm1533, %v1529, inf
        %1535 = vmin.xlane.f32.xlu0 %v1534
        %v1536 = vpop.xlane.xlu0 %1535
        %v1537 = vcvt.f32.s32 %v1536
        %v1538 = vcvt.f32.s32 %v1532
        %v1539 = vshll.u32 %v1538, 16
        %v1540 = vadd.s32 %v1539, %v1537
        %v1541 = vand.u32 %v1460, 65535
        %v1542 = vshra.s32 %v1460, 16
        %v1543 = vcvt.s32.f32 %v1541
        %v1544 = vcvt.s32.f32 %v1542
        %1545 = vmin.xlane.f32.xlu0 %v1544
        %v1546 = vpop.xlane.xlu0 %1545
        %vm1547 = vcmp.eq.f32.partialorder %v1544, %v1546
        %v1548 = vsel %vm1547, %v1543, inf
        %1549 = vmin.xlane.f32.xlu0 %v1548
        %v1550 = vpop.xlane.xlu0 %1549
        %v1551 = vcvt.f32.s32 %v1550
        %v1552 = vcvt.f32.s32 %v1546
        %v1553 = vshll.u32 %v1552, 16
        %v1554 = vadd.s32 %v1553, %v1551
        %v1555 = vand.u32 %v1461, 65535
        %v1556 = vshra.s32 %v1461, 16
        %v1557 = vcvt.s32.f32 %v1555
        %v1558 = vcvt.s32.f32 %v1556
        %1559 = vmin.xlane.f32.xlu0 %v1558
        %v1560 = vpop.xlane.xlu0 %1559
        %vm1561 = vcmp.eq.f32.partialorder %v1558, %v1560
        %v1562 = vsel %vm1561, %v1557, inf
        %1563 = vmin.xlane.f32.xlu0 %v1562
        %v1564 = vpop.xlane.xlu0 %1563
        %v1565 = vcvt.f32.s32 %v1564
        %v1566 = vcvt.f32.s32 %v1560
        %v1567 = vshll.u32 %v1566, 16
        %v1568 = vadd.s32 %v1567, %v1565
        %v1569 = vand.u32 %v1462, 65535
        %v1570 = vshra.s32 %v1462, 16
        %v1571 = vcvt.s32.f32 %v1569
        %v1572 = vcvt.s32.f32 %v1570
        %1573 = vmin.xlane.f32.xlu0 %v1572
        %v1574 = vpop.xlane.xlu0 %1573
        %vm1575 = vcmp.eq.f32.partialorder %v1572, %v1574
        %v1576 = vsel %vm1575, %v1571, inf
        %1577 = vmin.xlane.f32.xlu0 %v1576
        %v1578 = vpop.xlane.xlu0 %1577
        %v1579 = vcvt.f32.s32 %v1578
        %v1580 = vcvt.f32.s32 %v1574
        %v1581 = vshll.u32 %v1580, 16
        %v1582 = vadd.s32 %v1581, %v1579
        %v1583 = vand.u32 %v1463, 65535
        %v1584 = vshra.s32 %v1463, 16
        %v1585 = vcvt.s32.f32 %v1583
        %v1586 = vcvt.s32.f32 %v1584
        %1587 = vmin.xlane.f32.xlu0 %v1586
        %v1588 = vpop.xlane.xlu0 %1587
        %vm1589 = vcmp.eq.f32.partialorder %v1586, %v1588
        %v1590 = vsel %vm1589, %v1585, inf
        %1591 = vmin.xlane.f32.xlu0 %v1590
        %v1592 = vpop.xlane.xlu0 %1591
        %v1593 = vcvt.f32.s32 %v1592
        %v1594 = vcvt.f32.s32 %v1588
        %v1595 = vshll.u32 %v1594, 16
        %v1596 = vadd.s32 %v1595, %v1593
        %v1597 = vand.u32 %v1464, 65535
        %v1598 = vshra.s32 %v1464, 16
        %v1599 = vcvt.s32.f32 %v1597
        %v1600 = vcvt.s32.f32 %v1598
        %1601 = vmin.xlane.f32.xlu0 %v1600
        %v1602 = vpop.xlane.xlu0 %1601
        %vm1603 = vcmp.eq.f32.partialorder %v1600, %v1602
        %v1604 = vsel %vm1603, %v1599, inf
        %1605 = vmin.xlane.f32.xlu0 %v1604
        %v1606 = vpop.xlane.xlu0 %1605
        %v1607 = vcvt.f32.s32 %v1606
        %v1608 = vcvt.f32.s32 %v1602
        %v1609 = vshll.u32 %v1608, 16
        %v1610 = vadd.s32 %v1609, %v1607
        %v1611 = vand.u32 %v1465, 65535
        %v1612 = vshra.s32 %v1465, 16
        %v1613 = vcvt.s32.f32 %v1611
        %v1614 = vcvt.s32.f32 %v1612
        %1615 = vmin.xlane.f32.xlu0 %v1614
        %v1616 = vpop.xlane.xlu0 %1615
        %vm1617 = vcmp.eq.f32.partialorder %v1614, %v1616
        %v1618 = vsel %vm1617, %v1613, inf
        %1619 = vmin.xlane.f32.xlu0 %v1618
        %v1620 = vpop.xlane.xlu0 %1619
        %v1621 = vcvt.f32.s32 %v1620
        %v1622 = vcvt.f32.s32 %v1616
        %v1623 = vshll.u32 %v1622, 16
        %v1624 = vadd.s32 %v1623, %v1621
        %v1625 = vand.u32 %v1466, 65535
        %v1626 = vshra.s32 %v1466, 16
        %v1627 = vcvt.s32.f32 %v1625
        %v1628 = vcvt.s32.f32 %v1626
        %1629 = vmin.xlane.f32.xlu0 %v1628
        %v1630 = vpop.xlane.xlu0 %1629
        %vm1631 = vcmp.eq.f32.partialorder %v1628, %v1630
        %v1632 = vsel %vm1631, %v1627, inf
        %1633 = vmin.xlane.f32.xlu0 %v1632
        %v1634 = vpop.xlane.xlu0 %1633
        %v1635 = vcvt.f32.s32 %v1634
        %v1636 = vcvt.f32.s32 %v1630
        %v1637 = vshll.u32 %v1636, 16
        %v1638 = vadd.s32 %v1637, %v1635
        %v1639 = vand.u32 %v1467, 65535
        %v1640 = vshra.s32 %v1467, 16
        %v1641 = vcvt.s32.f32 %v1639
        %v1642 = vcvt.s32.f32 %v1640
        %1643 = vmin.xlane.f32.xlu0 %v1642
        %v1644 = vpop.xlane.xlu0 %1643
        %vm1645 = vcmp.eq.f32.partialorder %v1642, %v1644
        %v1646 = vsel %vm1645, %v1641, inf
        %1647 = vmin.xlane.f32.xlu0 %v1646
        %v1648 = vpop.xlane.xlu0 %1647
        %v1649 = vcvt.f32.s32 %v1648
        %v1650 = vcvt.f32.s32 %v1644
        %v1651 = vshll.u32 %v1650, 16
        %v1652 = vadd.s32 %v1651, %v1649
        %v1653 = vand.u32 %v1468, 65535
        %v1654 = vshra.s32 %v1468, 16
        %v1655 = vcvt.s32.f32 %v1653
        %v1656 = vcvt.s32.f32 %v1654
        %1657 = vmin.xlane.f32.xlu0 %v1656
        %v1658 = vpop.xlane.xlu0 %1657
        %vm1659 = vcmp.eq.f32.partialorder %v1656, %v1658
        %v1660 = vsel %vm1659, %v1655, inf
        %1661 = vmin.xlane.f32.xlu0 %v1660
        %v1662 = vpop.xlane.xlu0 %1661
        %v1663 = vcvt.f32.s32 %v1662
        %v1664 = vcvt.f32.s32 %v1658
        %v1665 = vshll.u32 %v1664, 16
        %v1666 = vadd.s32 %v1665, %v1663
        %v1667 = vand.u32 %v1469, 65535
        %v1668 = vshra.s32 %v1469, 16
        %v1669 = vcvt.s32.f32 %v1667
        %v1670 = vcvt.s32.f32 %v1668
        %1671 = vmin.xlane.f32.xlu0 %v1670
        %v1672 = vpop.xlane.xlu0 %1671
        %vm1673 = vcmp.eq.f32.partialorder %v1670, %v1672
        %v1674 = vsel %vm1673, %v1669, inf
        %1675 = vmin.xlane.f32.xlu0 %v1674
        %v1676 = vpop.xlane.xlu0 %1675
        %v1677 = vcvt.f32.s32 %v1676
        %v1678 = vcvt.f32.s32 %v1672
        %v1679 = vshll.u32 %v1678, 16
        %v1680 = vadd.s32 %v1679, %v1677
        %v1681 = vand.u32 %v1470, 65535
        %v1682 = vshra.s32 %v1470, 16
        %v1683 = vcvt.s32.f32 %v1681
        %v1684 = vcvt.s32.f32 %v1682
        %1685 = vmin.xlane.f32.xlu0 %v1684
        %v1686 = vpop.xlane.xlu0 %1685
        %vm1687 = vcmp.eq.f32.partialorder %v1684, %v1686
        %v1688 = vsel %vm1687, %v1683, inf
        %1689 = vmin.xlane.f32.xlu0 %v1688
        %v1690 = vpop.xlane.xlu0 %1689
        %v1691 = vcvt.f32.s32 %v1690
        %v1692 = vcvt.f32.s32 %v1686
        %v1693 = vshll.u32 %v1692, 16
        %v1694 = vadd.s32 %v1693, %v1691
        %v1695 = vsub.f32 %v1312, %v1406
        %v1696 = vsub.f32 %v1318, %v1408
        %v1697 = vsub.f32 %v1324, %v1410
        %v1698 = vsub.f32 %v1330, %v1412
        %v1699 = vsub.f32 %v1336, %v1414
        %v1700 = vsub.f32 %v1342, %v1416
        %v1701 = vsub.f32 %v1348, %v1418
        %v1702 = vsub.f32 %v1354, %v1420
        %v1703 = vsub.f32 %v1360, %v1422
        %v1704 = vsub.f32 %v1366, %v1424
        %v1705 = vsub.f32 %v1372, %v1426
        %v1706 = vsub.f32 %v1378, %v1428
        %v1707 = vsub.f32 %v1384, %v1430
        %v1708 = vsub.f32 %v1390, %v1432
        %v1709 = vsub.f32 %v1396, %v1434
        %v1710 = vsub.f32 %v1402, %v1436
        %v1711 = vmul.f32 %v1695, 1.442695
        %v1712 = vpow.pop %v1711
        %v1713 = vmul.f32 %v1696, 1.442695
        %v1714 = vpow.pop %v1713
        %v1715 = vmul.f32 %v1697, 1.442695
        %v1716 = vpow.pop %v1715
        %v1717 = vmul.f32 %v1698, 1.442695
        %v1718 = vpow.pop %v1717
        %v1719 = vmul.f32 %v1699, 1.442695
        %v1720 = vpow.pop %v1719
        %v1721 = vmul.f32 %v1700, 1.442695
        %v1722 = vpow.pop %v1721
        %v1723 = vmul.f32 %v1701, 1.442695
        %v1724 = vpow.pop %v1723
        %v1725 = vmul.f32 %v1702, 1.442695
        %v1726 = vpow.pop %v1725
        %v1727 = vmul.f32 %v1703, 1.442695
        %v1728 = vpow.pop %v1727
        %v1729 = vmul.f32 %v1704, 1.442695
        %v1730 = vpow.pop %v1729
        %v1731 = vmul.f32 %v1705, 1.442695
        %v1732 = vpow.pop %v1731
        %v1733 = vmul.f32 %v1706, 1.442695
        %v1734 = vpow.pop %v1733
        %v1735 = vmul.f32 %v1707, 1.442695
        %v1736 = vpow.pop %v1735
        %v1737 = vmul.f32 %v1708, 1.442695
        %v1738 = vpow.pop %v1737
        %v1739 = vmul.f32 %v1709, 1.442695
        %v1740 = vpow.pop %v1739
        %v1741 = vmul.f32 %v1710, 1.442695
        %v1742 = vpow.pop %v1741
        %1743 = vadd.xlane.f32.xlu0 %v1712
        %v1744 = vpop.xlane.xlu0 %1743
        %1745 = vadd.xlane.f32.xlu0 %v1714
        %v1746 = vpop.xlane.xlu0 %1745
        %1747 = vadd.xlane.f32.xlu0 %v1716
        %v1748 = vpop.xlane.xlu0 %1747
        %1749 = vadd.xlane.f32.xlu0 %v1718
        %v1750 = vpop.xlane.xlu0 %1749
        %1751 = vadd.xlane.f32.xlu0 %v1720
        %v1752 = vpop.xlane.xlu0 %1751
        %1753 = vadd.xlane.f32.xlu0 %v1722
        %v1754 = vpop.xlane.xlu0 %1753
        %1755 = vadd.xlane.f32.xlu0 %v1724
        %v1756 = vpop.xlane.xlu0 %1755
        %1757 = vadd.xlane.f32.xlu0 %v1726
        %v1758 = vpop.xlane.xlu0 %1757
        %1759 = vadd.xlane.f32.xlu0 %v1728
        %v1760 = vpop.xlane.xlu0 %1759
        %1761 = vadd.xlane.f32.xlu0 %v1730
        %v1762 = vpop.xlane.xlu0 %1761
        %1763 = vadd.xlane.f32.xlu0 %v1732
        %v1764 = vpop.xlane.xlu0 %1763
        %1765 = vadd.xlane.f32.xlu0 %v1734
        %v1766 = vpop.xlane.xlu0 %1765
        %1767 = vadd.xlane.f32.xlu0 %v1736
        %v1768 = vpop.xlane.xlu0 %1767
        %1769 = vadd.xlane.f32.xlu0 %v1738
        %v1770 = vpop.xlane.xlu0 %1769
        %1771 = vadd.xlane.f32.xlu0 %v1740
        %v1772 = vpop.xlane.xlu0 %1771
        %1773 = vadd.xlane.f32.xlu0 %v1742
        %v1774 = vpop.xlane.xlu0 %1773
        %v1775 = vrcp.pop %v1744
        %v1776 = vmul.f32 1.0, %v1775
        %v1777 = vrcp.pop %v1746
        %v1778 = vmul.f32 1.0, %v1777
        %v1779 = vrcp.pop %v1748
        %v1780 = vmul.f32 1.0, %v1779
        %v1781 = vrcp.pop %v1750
        %v1782 = vmul.f32 1.0, %v1781
        %v1783 = vrcp.pop %v1752
        %v1784 = vmul.f32 1.0, %v1783
        %v1785 = vrcp.pop %v1754
        %v1786 = vmul.f32 1.0, %v1785
        %v1787 = vrcp.pop %v1756
        %v1788 = vmul.f32 1.0, %v1787
        %v1789 = vrcp.pop %v1758
        %v1790 = vmul.f32 1.0, %v1789
        %v1791 = vrcp.pop %v1760
        %v1792 = vmul.f32 1.0, %v1791
        %v1793 = vrcp.pop %v1762
        %v1794 = vmul.f32 1.0, %v1793
        %v1795 = vrcp.pop %v1764
        %v1796 = vmul.f32 1.0, %v1795
        %v1797 = vrcp.pop %v1766
        %v1798 = vmul.f32 1.0, %v1797
        %v1799 = vrcp.pop %v1768
        %v1800 = vmul.f32 1.0, %v1799
        %v1801 = vrcp.pop %v1770
        %v1802 = vmul.f32 1.0, %v1801
        %v1803 = vrcp.pop %v1772
        %v1804 = vmul.f32 1.0, %v1803
        %v1805 = vrcp.pop %v1774
        %v1806 = vmul.f32 1.0, %v1805
        %v1807 = vld [vmem:[%s3] sm:$0xf]
        %v1808 = vlaneseq
        %v1809 = vshrl.u32 %v1808, 7
        %v1810 = vsub.s32 0, %v1809
        %v1811 = vrot.slane %v1807, %v1810
        %vm1812 = vcmp.lt.f32.partialorder %v1811, %v1776
        %vm1813 = vcmp.lt.f32.partialorder %v1811, %v1778
        %vm1814 = vcmp.lt.f32.partialorder %v1811, %v1780
        %vm1815 = vcmp.lt.f32.partialorder %v1811, %v1782
        %vm1816 = vcmp.lt.f32.partialorder %v1811, %v1784
        %vm1817 = vcmp.lt.f32.partialorder %v1811, %v1786
        %vm1818 = vcmp.lt.f32.partialorder %v1811, %v1788
        %vm1819 = vcmp.lt.f32.partialorder %v1811, %v1790
        %vm1820 = vcmp.lt.f32.partialorder %v1811, %v1792
        %vm1821 = vcmp.lt.f32.partialorder %v1811, %v1794
        %vm1822 = vcmp.lt.f32.partialorder %v1811, %v1796
        %vm1823 = vcmp.lt.f32.partialorder %v1811, %v1798
        %vm1824 = vcmp.lt.f32.partialorder %v1811, %v1800
        %vm1825 = vcmp.lt.f32.partialorder %v1811, %v1802
        %vm1826 = vcmp.lt.f32.partialorder %v1811, %v1804
        %vm1827 = vcmp.lt.f32.partialorder %v1811, %v1806
        %v1828 = vsel %vm1812, 1, 0
        %v1829 = vsel %vm1813, 1, 0
        %v1830 = vsel %vm1814, 1, 0
        %v1831 = vsel %vm1815, 1, 0
        %v1832 = vsel %vm1816, 1, 0
        %v1833 = vsel %vm1817, 1, 0
        %v1834 = vsel %vm1818, 1, 0
        %v1835 = vsel %vm1819, 1, 0
        %v1836 = vsel %vm1820, 1, 0
        %v1837 = vsel %vm1821, 1, 0
        %v1838 = vsel %vm1822, 1, 0
        %v1839 = vsel %vm1823, 1, 0
        %v1840 = vsel %vm1824, 1, 0
        %v1841 = vsel %vm1825, 1, 0
        %v1842 = vsel %vm1826, 1, 0
        %v1843 = vsel %vm1827, 1, 0
        %vm1844 = vcmask 130048
        %v1845 = vsel %vm1844, %v1828, 0
        %v1846 = vand.u32 %v1845, 65535
        %v1847 = vshrl.u32 %v1845, 16
        %v1848 = vcvt.s32.f32 %v1846
        %v1849 = vcvt.s32.f32 %v1847
        %1850 = vadd.xlane.f32.xlu0 %v1848
        %v1851 = vpop.xlane.xlu0 %1850
        %1852 = vadd.xlane.f32.xlu0 %v1849
        %v1853 = vpop.xlane.xlu0 %1852
        %v1854 = vcvt.f32.s32 %v1851
        %v1855 = vcvt.f32.s32 %v1853
        %v1856 = vshll.u32 %v1855, 16
        %v1857 = vadd.s32 %v1856, %v1854
        %v1858 = vsel %vm1844, %v1829, 0
        %v1859 = vand.u32 %v1858, 65535
        %v1860 = vshrl.u32 %v1858, 16
        %v1861 = vcvt.s32.f32 %v1859
        %v1862 = vcvt.s32.f32 %v1860
        %1863 = vadd.xlane.f32.xlu0 %v1861
        %v1864 = vpop.xlane.xlu0 %1863
        %1865 = vadd.xlane.f32.xlu0 %v1862
        %v1866 = vpop.xlane.xlu0 %1865
        %v1867 = vcvt.f32.s32 %v1864
        %v1868 = vcvt.f32.s32 %v1866
        %v1869 = vshll.u32 %v1868, 16
        %v1870 = vadd.s32 %v1869, %v1867
        %v1871 = vsel %vm1844, %v1830, 0
        %v1872 = vand.u32 %v1871, 65535
        %v1873 = vshrl.u32 %v1871, 16
        %v1874 = vcvt.s32.f32 %v1872
        %v1875 = vcvt.s32.f32 %v1873
        %1876 = vadd.xlane.f32.xlu0 %v1874
        %v1877 = vpop.xlane.xlu0 %1876
        %1878 = vadd.xlane.f32.xlu0 %v1875
        %v1879 = vpop.xlane.xlu0 %1878
        %v1880 = vcvt.f32.s32 %v1877
        %v1881 = vcvt.f32.s32 %v1879
        %v1882 = vshll.u32 %v1881, 16
        %v1883 = vadd.s32 %v1882, %v1880
        %v1884 = vsel %vm1844, %v1831, 0
        %v1885 = vand.u32 %v1884, 65535
        %v1886 = vshrl.u32 %v1884, 16
        %v1887 = vcvt.s32.f32 %v1885
        %v1888 = vcvt.s32.f32 %v1886
        %1889 = vadd.xlane.f32.xlu0 %v1887
        %v1890 = vpop.xlane.xlu0 %1889
        %1891 = vadd.xlane.f32.xlu0 %v1888
        %v1892 = vpop.xlane.xlu0 %1891
        %v1893 = vcvt.f32.s32 %v1890
        %v1894 = vcvt.f32.s32 %v1892
        %v1895 = vshll.u32 %v1894, 16
        %v1896 = vadd.s32 %v1895, %v1893
        %v1897 = vsel %vm1844, %v1832, 0
        %v1898 = vand.u32 %v1897, 65535
        %v1899 = vshrl.u32 %v1897, 16
        %v1900 = vcvt.s32.f32 %v1898
        %v1901 = vcvt.s32.f32 %v1899
        %1902 = vadd.xlane.f32.xlu0 %v1900
        %v1903 = vpop.xlane.xlu0 %1902
        %1904 = vadd.xlane.f32.xlu0 %v1901
        %v1905 = vpop.xlane.xlu0 %1904
        %v1906 = vcvt.f32.s32 %v1903
        %v1907 = vcvt.f32.s32 %v1905
        %v1908 = vshll.u32 %v1907, 16
        %v1909 = vadd.s32 %v1908, %v1906
        %v1910 = vsel %vm1844, %v1833, 0
        %v1911 = vand.u32 %v1910, 65535
        %v1912 = vshrl.u32 %v1910, 16
        %v1913 = vcvt.s32.f32 %v1911
        %v1914 = vcvt.s32.f32 %v1912
        %1915 = vadd.xlane.f32.xlu0 %v1913
        %v1916 = vpop.xlane.xlu0 %1915
        %1917 = vadd.xlane.f32.xlu0 %v1914
        %v1918 = vpop.xlane.xlu0 %1917
        %v1919 = vcvt.f32.s32 %v1916
        %v1920 = vcvt.f32.s32 %v1918
        %v1921 = vshll.u32 %v1920, 16
        %v1922 = vadd.s32 %v1921, %v1919
        %v1923 = vsel %vm1844, %v1834, 0
        %v1924 = vand.u32 %v1923, 65535
        %v1925 = vshrl.u32 %v1923, 16
        %v1926 = vcvt.s32.f32 %v1924
        %v1927 = vcvt.s32.f32 %v1925
        %1928 = vadd.xlane.f32.xlu0 %v1926
        %v1929 = vpop.xlane.xlu0 %1928
        %1930 = vadd.xlane.f32.xlu0 %v1927
        %v1931 = vpop.xlane.xlu0 %1930
        %v1932 = vcvt.f32.s32 %v1929
        %v1933 = vcvt.f32.s32 %v1931
        %v1934 = vshll.u32 %v1933, 16
        %v1935 = vadd.s32 %v1934, %v1932
        %v1936 = vsel %vm1844, %v1835, 0
        %v1937 = vand.u32 %v1936, 65535
        %v1938 = vshrl.u32 %v1936, 16
        %v1939 = vcvt.s32.f32 %v1937
        %v1940 = vcvt.s32.f32 %v1938
        %1941 = vadd.xlane.f32.xlu0 %v1939
        %v1942 = vpop.xlane.xlu0 %1941
        %1943 = vadd.xlane.f32.xlu0 %v1940
        %v1944 = vpop.xlane.xlu0 %1943
        %v1945 = vcvt.f32.s32 %v1942
        %v1946 = vcvt.f32.s32 %v1944
        %v1947 = vshll.u32 %v1946, 16
        %v1948 = vadd.s32 %v1947, %v1945
        %v1949 = vsel %vm1844, %v1836, 0
        %v1950 = vand.u32 %v1949, 65535
        %v1951 = vshrl.u32 %v1949, 16
        %v1952 = vcvt.s32.f32 %v1950
        %v1953 = vcvt.s32.f32 %v1951
        %1954 = vadd.xlane.f32.xlu0 %v1952
        %v1955 = vpop.xlane.xlu0 %1954
        %1956 = vadd.xlane.f32.xlu0 %v1953
        %v1957 = vpop.xlane.xlu0 %1956
        %v1958 = vcvt.f32.s32 %v1955
        %v1959 = vcvt.f32.s32 %v1957
        %v1960 = vshll.u32 %v1959, 16
        %v1961 = vadd.s32 %v1960, %v1958
        %v1962 = vsel %vm1844, %v1837, 0
        %v1963 = vand.u32 %v1962, 65535
        %v1964 = vshrl.u32 %v1962, 16
        %v1965 = vcvt.s32.f32 %v1963
        %v1966 = vcvt.s32.f32 %v1964
        %1967 = vadd.xlane.f32.xlu0 %v1965
        %v1968 = vpop.xlane.xlu0 %1967
        %1969 = vadd.xlane.f32.xlu0 %v1966
        %v1970 = vpop.xlane.xlu0 %1969
        %v1971 = vcvt.f32.s32 %v1968
        %v1972 = vcvt.f32.s32 %v1970
        %v1973 = vshll.u32 %v1972, 16
        %v1974 = vadd.s32 %v1973, %v1971
        %v1975 = vsel %vm1844, %v1838, 0
        %v1976 = vand.u32 %v1975, 65535
        %v1977 = vshrl.u32 %v1975, 16
        %v1978 = vcvt.s32.f32 %v1976
        %v1979 = vcvt.s32.f32 %v1977
        %1980 = vadd.xlane.f32.xlu0 %v1978
        %v1981 = vpop.xlane.xlu0 %1980
        %1982 = vadd.xlane.f32.xlu0 %v1979
        %v1983 = vpop.xlane.xlu0 %1982
        %v1984 = vcvt.f32.s32 %v1981
        %v1985 = vcvt.f32.s32 %v1983
        %v1986 = vshll.u32 %v1985, 16
        %v1987 = vadd.s32 %v1986, %v1984
        %v1988 = vsel %vm1844, %v1839, 0
        %v1989 = vand.u32 %v1988, 65535
        %v1990 = vshrl.u32 %v1988, 16
        %v1991 = vcvt.s32.f32 %v1989
        %v1992 = vcvt.s32.f32 %v1990
        %1993 = vadd.xlane.f32.xlu0 %v1991
        %v1994 = vpop.xlane.xlu0 %1993
        %1995 = vadd.xlane.f32.xlu0 %v1992
        %v1996 = vpop.xlane.xlu0 %1995
        %v1997 = vcvt.f32.s32 %v1994
        %v1998 = vcvt.f32.s32 %v1996
        %v1999 = vshll.u32 %v1998, 16
        %v2000 = vadd.s32 %v1999, %v1997
        %v2001 = vsel %vm1844, %v1840, 0
        %v2002 = vand.u32 %v2001, 65535
        %v2003 = vshrl.u32 %v2001, 16
        %v2004 = vcvt.s32.f32 %v2002
        %v2005 = vcvt.s32.f32 %v2003
        %2006 = vadd.xlane.f32.xlu0 %v2004
        %v2007 = vpop.xlane.xlu0 %2006
        %2008 = vadd.xlane.f32.xlu0 %v2005
        %v2009 = vpop.xlane.xlu0 %2008
        %v2010 = vcvt.f32.s32 %v2007
        %v2011 = vcvt.f32.s32 %v2009
        %v2012 = vshll.u32 %v2011, 16
        %v2013 = vadd.s32 %v2012, %v2010
        %v2014 = vsel %vm1844, %v1841, 0
        %v2015 = vand.u32 %v2014, 65535
        %v2016 = vshrl.u32 %v2014, 16
        %v2017 = vcvt.s32.f32 %v2015
        %v2018 = vcvt.s32.f32 %v2016
        %2019 = vadd.xlane.f32.xlu0 %v2017
        %v2020 = vpop.xlane.xlu0 %2019
        %2021 = vadd.xlane.f32.xlu0 %v2018
        %v2022 = vpop.xlane.xlu0 %2021
        %v2023 = vcvt.f32.s32 %v2020
        %v2024 = vcvt.f32.s32 %v2022
        %v2025 = vshll.u32 %v2024, 16
        %v2026 = vadd.s32 %v2025, %v2023
        %v2027 = vsel %vm1844, %v1842, 0
        %v2028 = vand.u32 %v2027, 65535
        %v2029 = vshrl.u32 %v2027, 16
        %v2030 = vcvt.s32.f32 %v2028
        %v2031 = vcvt.s32.f32 %v2029
        %2032 = vadd.xlane.f32.xlu0 %v2030
        %v2033 = vpop.xlane.xlu0 %2032
        %2034 = vadd.xlane.f32.xlu0 %v2031
        %v2035 = vpop.xlane.xlu0 %2034
        %v2036 = vcvt.f32.s32 %v2033
        %v2037 = vcvt.f32.s32 %v2035
        %v2038 = vshll.u32 %v2037, 16
        %v2039 = vadd.s32 %v2038, %v2036
        %v2040 = vsel %vm1844, %v1843, 0
        %v2041 = vand.u32 %v2040, 65535
        %v2042 = vshrl.u32 %v2040, 16
        %v2043 = vcvt.s32.f32 %v2041
        %v2044 = vcvt.s32.f32 %v2042
        %2045 = vadd.xlane.f32.xlu0 %v2043
        %v2046 = vpop.xlane.xlu0 %2045
        %2047 = vadd.xlane.f32.xlu0 %v2044
        %v2048 = vpop.xlane.xlu0 %2047
        %v2049 = vcvt.f32.s32 %v2046
        %v2050 = vcvt.f32.s32 %v2048
        %v2051 = vshll.u32 %v2050, 16
        %v2052 = vadd.s32 %v2051, %v2049
        %vm2053 = vcmp.gt.s32.totalorder %v1857, 1
        %v2054 = vsel %vm2053, %v1857, 1
        %vm2055 = vcmp.gt.s32.totalorder %v1870, 1
        %v2056 = vsel %vm2055, %v1870, 1
        %vm2057 = vcmp.gt.s32.totalorder %v1883, 1
        %v2058 = vsel %vm2057, %v1883, 1
        %vm2059 = vcmp.gt.s32.totalorder %v1896, 1
        %v2060 = vsel %vm2059, %v1896, 1
        %vm2061 = vcmp.gt.s32.totalorder %v1909, 1
        %v2062 = vsel %vm2061, %v1909, 1
        %vm2063 = vcmp.gt.s32.totalorder %v1922, 1
        %v2064 = vsel %vm2063, %v1922, 1
        %vm2065 = vcmp.gt.s32.totalorder %v1935, 1
        %v2066 = vsel %vm2065, %v1935, 1
        %vm2067 = vcmp.gt.s32.totalorder %v1948, 1
        %v2068 = vsel %vm2067, %v1948, 1
        %vm2069 = vcmp.gt.s32.totalorder %v1961, 1
        %v2070 = vsel %vm2069, %v1961, 1
        %vm2071 = vcmp.gt.s32.totalorder %v1974, 1
        %v2072 = vsel %vm2071, %v1974, 1
        %vm2073 = vcmp.gt.s32.totalorder %v1987, 1
        %v2074 = vsel %vm2073, %v1987, 1
        %vm2075 = vcmp.gt.s32.totalorder %v2000, 1
        %v2076 = vsel %vm2075, %v2000, 1
        %vm2077 = vcmp.gt.s32.totalorder %v2013, 1
        %v2078 = vsel %vm2077, %v2013, 1
        %vm2079 = vcmp.gt.s32.totalorder %v2026, 1
        %v2080 = vsel %vm2079, %v2026, 1
        %vm2081 = vcmp.gt.s32.totalorder %v2039, 1
        %v2082 = vsel %vm2081, %v2039, 1
        %vm2083 = vcmp.gt.s32.totalorder %v2052, 1
        %v2084 = vsel %vm2083, %v2052, 1
        %vm2085 = vcmp.lt.s32.totalorder %v2054, 15
        %v2086 = vsel %vm2085, %v2054, 15
        %vm2087 = vcmp.lt.s32.totalorder %v2056, 15
        %v2088 = vsel %vm2087, %v2056, 15
        %vm2089 = vcmp.lt.s32.totalorder %v2058, 15
        %v2090 = vsel %vm2089, %v2058, 15
        %vm2091 = vcmp.lt.s32.totalorder %v2060, 15
        %v2092 = vsel %vm2091, %v2060, 15
        %vm2093 = vcmp.lt.s32.totalorder %v2062, 15
        %v2094 = vsel %vm2093, %v2062, 15
        %vm2095 = vcmp.lt.s32.totalorder %v2064, 15
        %v2096 = vsel %vm2095, %v2064, 15
        %vm2097 = vcmp.lt.s32.totalorder %v2066, 15
        %v2098 = vsel %vm2097, %v2066, 15
        %vm2099 = vcmp.lt.s32.totalorder %v2068, 15
        %v2100 = vsel %vm2099, %v2068, 15
        %vm2101 = vcmp.lt.s32.totalorder %v2070, 15
        %v2102 = vsel %vm2101, %v2070, 15
        %vm2103 = vcmp.lt.s32.totalorder %v2072, 15
        %v2104 = vsel %vm2103, %v2072, 15
        %vm2105 = vcmp.lt.s32.totalorder %v2074, 15
        %v2106 = vsel %vm2105, %v2074, 15
        %vm2107 = vcmp.lt.s32.totalorder %v2076, 15
        %v2108 = vsel %vm2107, %v2076, 15
        %vm2109 = vcmp.lt.s32.totalorder %v2078, 15
        %v2110 = vsel %vm2109, %v2078, 15
        %vm2111 = vcmp.lt.s32.totalorder %v2080, 15
        %v2112 = vsel %vm2111, %v2080, 15
        %vm2113 = vcmp.lt.s32.totalorder %v2082, 15
        %v2114 = vsel %vm2113, %v2082, 15
        %vm2115 = vcmp.lt.s32.totalorder %v2084, 15
        %v2116 = vsel %vm2115, %v2084, 15
        %vm2117 = vcmp.eq.s32.totalorder %v1438, %v2086
        %vm2118 = vcmp.eq.s32.totalorder %v1438, %v2088
        %vm2119 = vcmp.eq.s32.totalorder %v1438, %v2090
        %vm2120 = vcmp.eq.s32.totalorder %v1438, %v2092
        %vm2121 = vcmp.eq.s32.totalorder %v1438, %v2094
        %vm2122 = vcmp.eq.s32.totalorder %v1438, %v2096
        %vm2123 = vcmp.eq.s32.totalorder %v1438, %v2098
        %vm2124 = vcmp.eq.s32.totalorder %v1438, %v2100
        %vm2125 = vcmp.eq.s32.totalorder %v1438, %v2102
        %vm2126 = vcmp.eq.s32.totalorder %v1438, %v2104
        %vm2127 = vcmp.eq.s32.totalorder %v1438, %v2106
        %vm2128 = vcmp.eq.s32.totalorder %v1438, %v2108
        %vm2129 = vcmp.eq.s32.totalorder %v1438, %v2110
        %vm2130 = vcmp.eq.s32.totalorder %v1438, %v2112
        %vm2131 = vcmp.eq.s32.totalorder %v1438, %v2114
        %vm2132 = vcmp.eq.s32.totalorder %v1438, %v2116
        %v2133 = vsel %vm2117, 1, 0
        %v2134 = vsel %vm2118, 1, 0
        %v2135 = vsel %vm2119, 1, 0
        %v2136 = vsel %vm2120, 1, 0
        %v2137 = vsel %vm2121, 1, 0
        %v2138 = vsel %vm2122, 1, 0
        %v2139 = vsel %vm2123, 1, 0
        %v2140 = vsel %vm2124, 1, 0
        %v2141 = vsel %vm2125, 1, 0
        %v2142 = vsel %vm2126, 1, 0
        %v2143 = vsel %vm2127, 1, 0
        %v2144 = vsel %vm2128, 1, 0
        %v2145 = vsel %vm2129, 1, 0
        %v2146 = vsel %vm2130, 1, 0
        %v2147 = vsel %vm2131, 1, 0
        %v2148 = vsel %vm2132, 1, 0
        %v2149 = vcvt.s32.f32 %v2133
        %v2150 = vcvt.s32.f32 %v2134
        %v2151 = vcvt.s32.f32 %v2135
        %v2152 = vcvt.s32.f32 %v2136
        %v2153 = vcvt.s32.f32 %v2137
        %v2154 = vcvt.s32.f32 %v2138
        %v2155 = vcvt.s32.f32 %v2139
        %v2156 = vcvt.s32.f32 %v2140
        %v2157 = vcvt.s32.f32 %v2141
        %v2158 = vcvt.s32.f32 %v2142
        %v2159 = vcvt.s32.f32 %v2143
        %v2160 = vcvt.s32.f32 %v2144
        %v2161 = vcvt.s32.f32 %v2145
        %v2162 = vcvt.s32.f32 %v2146
        %v2163 = vcvt.s32.f32 %v2147
        %v2164 = vcvt.s32.f32 %v2148
        %v2165 = vlaneseq
        %v2166 = vshrl.u32 %v2165, 7
        %v2167 = vsub.s32 3, %v2166
        %v2168 = vrot.slane %v1807, %v2167
        %v2169 = vmul.f32 %v2168, %v1776
        %v2170 = vmul.f32 %v2168, %v1778
        %v2171 = vmul.f32 %v2168, %v1780
        %v2172 = vmul.f32 %v2168, %v1782
        %v2173 = vmul.f32 %v2168, %v1784
        %v2174 = vmul.f32 %v2168, %v1786
        %v2175 = vmul.f32 %v2168, %v1788
        %v2176 = vmul.f32 %v2168, %v1790
        %v2177 = vmul.f32 %v2168, %v1792
        %v2178 = vmul.f32 %v2168, %v1794
        %v2179 = vmul.f32 %v2168, %v1796
        %v2180 = vmul.f32 %v2168, %v1798
        %v2181 = vmul.f32 %v2168, %v1800
        %v2182 = vmul.f32 %v2168, %v1802
        %v2183 = vmul.f32 %v2168, %v1804
        %v2184 = vmul.f32 %v2168, %v1806
        %v2185 = vlaneseq
        %v2186 = vshrl.u32 %v2185, 7
        %v2187 = vsub.s32 2, %v2186
        %v2188 = vrot.slane %v1807, %v2187
        %v2189 = vadd.f32 %v2188, %v2169
        %v2190 = vadd.f32 %v2188, %v2170
        %v2191 = vadd.f32 %v2188, %v2171
        %v2192 = vadd.f32 %v2188, %v2172
        %v2193 = vadd.f32 %v2188, %v2173
        %v2194 = vadd.f32 %v2188, %v2174
        %v2195 = vadd.f32 %v2188, %v2175
        %v2196 = vadd.f32 %v2188, %v2176
        %v2197 = vadd.f32 %v2188, %v2177
        %v2198 = vadd.f32 %v2188, %v2178
        %v2199 = vadd.f32 %v2188, %v2179
        %v2200 = vadd.f32 %v2188, %v2180
        %v2201 = vadd.f32 %v2188, %v2181
        %v2202 = vadd.f32 %v2188, %v2182
        %v2203 = vadd.f32 %v2188, %v2183
        %v2204 = vadd.f32 %v2188, %v2184
        %v2205 = vmul.f32 %v2149, %v2189
        %v2206 = vmul.f32 %v2150, %v2190
        %v2207 = vmul.f32 %v2151, %v2191
        %v2208 = vmul.f32 %v2152, %v2192
        %v2209 = vmul.f32 %v2153, %v2193
        %v2210 = vmul.f32 %v2154, %v2194
        %v2211 = vmul.f32 %v2155, %v2195
        %v2212 = vmul.f32 %v2156, %v2196
        %v2213 = vmul.f32 %v2157, %v2197
        %v2214 = vmul.f32 %v2158, %v2198
        %v2215 = vmul.f32 %v2159, %v2199
        %v2216 = vmul.f32 %v2160, %v2200
        %v2217 = vmul.f32 %v2161, %v2201
        %v2218 = vmul.f32 %v2162, %v2202
        %v2219 = vmul.f32 %v2163, %v2203
        %v2220 = vmul.f32 %v2164, %v2204
        %v2221 = vsel %vm1844, %v2205, 0.0
        %2222 = vadd.xlane.f32.xlu0 %v2221
        %v2223 = vpop.xlane.xlu0 %2222
        %v2224 = vsel %vm1844, %v2206, 0.0
        %2225 = vadd.xlane.f32.xlu0 %v2224
        %v2226 = vpop.xlane.xlu0 %2225
        %v2227 = vsel %vm1844, %v2207, 0.0
        %2228 = vadd.xlane.f32.xlu0 %v2227
        %v2229 = vpop.xlane.xlu0 %2228
        %v2230 = vsel %vm1844, %v2208, 0.0
        %2231 = vadd.xlane.f32.xlu0 %v2230
        %v2232 = vpop.xlane.xlu0 %2231
        %v2233 = vsel %vm1844, %v2209, 0.0
        %2234 = vadd.xlane.f32.xlu0 %v2233
        %v2235 = vpop.xlane.xlu0 %2234
        %v2236 = vsel %vm1844, %v2210, 0.0
        %2237 = vadd.xlane.f32.xlu0 %v2236
        %v2238 = vpop.xlane.xlu0 %2237
        %v2239 = vsel %vm1844, %v2211, 0.0
        %2240 = vadd.xlane.f32.xlu0 %v2239
        %v2241 = vpop.xlane.xlu0 %2240
        %v2242 = vsel %vm1844, %v2212, 0.0
        %2243 = vadd.xlane.f32.xlu0 %v2242
        %v2244 = vpop.xlane.xlu0 %2243
        %v2245 = vsel %vm1844, %v2213, 0.0
        %2246 = vadd.xlane.f32.xlu0 %v2245
        %v2247 = vpop.xlane.xlu0 %2246
        %v2248 = vsel %vm1844, %v2214, 0.0
        %2249 = vadd.xlane.f32.xlu0 %v2248
        %v2250 = vpop.xlane.xlu0 %2249
        %v2251 = vsel %vm1844, %v2215, 0.0
        %2252 = vadd.xlane.f32.xlu0 %v2251
        %v2253 = vpop.xlane.xlu0 %2252
        %v2254 = vsel %vm1844, %v2216, 0.0
        %2255 = vadd.xlane.f32.xlu0 %v2254
        %v2256 = vpop.xlane.xlu0 %2255
        %v2257 = vsel %vm1844, %v2217, 0.0
        %2258 = vadd.xlane.f32.xlu0 %v2257
        %v2259 = vpop.xlane.xlu0 %2258
        %v2260 = vsel %vm1844, %v2218, 0.0
        %2261 = vadd.xlane.f32.xlu0 %v2260
        %v2262 = vpop.xlane.xlu0 %2261
        %v2263 = vsel %vm1844, %v2219, 0.0
        %2264 = vadd.xlane.f32.xlu0 %v2263
        %v2265 = vpop.xlane.xlu0 %2264
        %v2266 = vsel %vm1844, %v2220, 0.0
        %2267 = vadd.xlane.f32.xlu0 %v2266
        %v2268 = vpop.xlane.xlu0 %2267
        %vm2269 = vcmp.ge.f32.partialorder %v1776, %v1811
        %vm2270 = vcmp.ge.f32.partialorder %v1778, %v1811
        %vm2271 = vcmp.ge.f32.partialorder %v1780, %v1811
        %vm2272 = vcmp.ge.f32.partialorder %v1782, %v1811
        %vm2273 = vcmp.ge.f32.partialorder %v1784, %v1811
        %vm2274 = vcmp.ge.f32.partialorder %v1786, %v1811
        %vm2275 = vcmp.ge.f32.partialorder %v1788, %v1811
        %vm2276 = vcmp.ge.f32.partialorder %v1790, %v1811
        %vm2277 = vcmp.ge.f32.partialorder %v1792, %v1811
        %vm2278 = vcmp.ge.f32.partialorder %v1794, %v1811
        %vm2279 = vcmp.ge.f32.partialorder %v1796, %v1811
        %vm2280 = vcmp.ge.f32.partialorder %v1798, %v1811
        %vm2281 = vcmp.ge.f32.partialorder %v1800, %v1811
        %vm2282 = vcmp.ge.f32.partialorder %v1802, %v1811
        %vm2283 = vcmp.ge.f32.partialorder %v1804, %v1811
        %vm2284 = vcmp.ge.f32.partialorder %v1806, %v1811
        %vm2285 = vcmp.le.f32.partialorder %v1776, %v1811
        %vm2286 = vcmp.le.f32.partialorder %v1778, %v1811
        %vm2287 = vcmp.le.f32.partialorder %v1780, %v1811
        %vm2288 = vcmp.le.f32.partialorder %v1782, %v1811
        %vm2289 = vcmp.le.f32.partialorder %v1784, %v1811
        %vm2290 = vcmp.le.f32.partialorder %v1786, %v1811
        %vm2291 = vcmp.le.f32.partialorder %v1788, %v1811
        %vm2292 = vcmp.le.f32.partialorder %v1790, %v1811
        %vm2293 = vcmp.le.f32.partialorder %v1792, %v1811
        %vm2294 = vcmp.le.f32.partialorder %v1794, %v1811
        %vm2295 = vcmp.le.f32.partialorder %v1796, %v1811
        %vm2296 = vcmp.le.f32.partialorder %v1798, %v1811
        %vm2297 = vcmp.le.f32.partialorder %v1800, %v1811
        %vm2298 = vcmp.le.f32.partialorder %v1802, %v1811
        %vm2299 = vcmp.le.f32.partialorder %v1804, %v1811
        %vm2300 = vcmp.le.f32.partialorder %v1806, %v1811
        %v2301 = vlaneseq
        %v2302 = vshrl.u32 %v2301, 7
        %v2303 = vsub.s32 1, %v2302
        %v2304 = vrot.slane %v1807, %v2303
        %v2305 = vsel %vm2285, %v2304, %v2223
        %v2306 = vsel %vm2286, %v2304, %v2226
        %v2307 = vsel %vm2287, %v2304, %v2229
        %v2308 = vsel %vm2288, %v2304, %v2232
        %v2309 = vsel %vm2289, %v2304, %v2235
        %v2310 = vsel %vm2290, %v2304, %v2238
        %v2311 = vsel %vm2291, %v2304, %v2241
        %v2312 = vsel %vm2292, %v2304, %v2244
        %v2313 = vsel %vm2293, %v2304, %v2247
        %v2314 = vsel %vm2294, %v2304, %v2250
        %v2315 = vsel %vm2295, %v2304, %v2253
        %v2316 = vsel %vm2296, %v2304, %v2256
        %v2317 = vsel %vm2297, %v2304, %v2259
        %v2318 = vsel %vm2298, %v2304, %v2262
        %v2319 = vsel %vm2299, %v2304, %v2265
        %v2320 = vsel %vm2300, %v2304, %v2268
        %2337 = vrot.lane.b32.xlu0 %v2305, 15
        %v2338 = vpop.permute.xlu0 %2337
        %2339 = vrot.lane.b32.xlu0 %v2306, 15
        %v2340 = vpop.permute.xlu0 %2339
        %2341 = vrot.lane.b32.xlu0 %v2307, 15
        %v2342 = vpop.permute.xlu0 %2341
        %2343 = vrot.lane.b32.xlu0 %v2308, 15
        %v2344 = vpop.permute.xlu0 %2343
        %2345 = vrot.lane.b32.xlu0 %v2309, 15
        %v2346 = vpop.permute.xlu0 %2345
        %2347 = vrot.lane.b32.xlu0 %v2310, 15
        %v2348 = vpop.permute.xlu0 %2347
        %2349 = vrot.lane.b32.xlu0 %v2311, 15
        %v2350 = vpop.permute.xlu0 %2349
        %2351 = vrot.lane.b32.xlu0 %v2312, 15
        %v2352 = vpop.permute.xlu0 %2351
        %2353 = vrot.lane.b32.xlu0 %v2313, 15
        %v2354 = vpop.permute.xlu0 %2353
        %2355 = vrot.lane.b32.xlu0 %v2314, 15
        %v2356 = vpop.permute.xlu0 %2355
        %2357 = vrot.lane.b32.xlu0 %v2315, 15
        %v2358 = vpop.permute.xlu0 %2357
        %2359 = vrot.lane.b32.xlu0 %v2316, 15
        %v2360 = vpop.permute.xlu0 %2359
        %2361 = vrot.lane.b32.xlu0 %v2317, 15
        %v2362 = vpop.permute.xlu0 %2361
        %2363 = vrot.lane.b32.xlu0 %v2318, 15
        %v2364 = vpop.permute.xlu0 %2363
        %2365 = vrot.lane.b32.xlu0 %v2319, 15
        %v2366 = vpop.permute.xlu0 %2365
        %2367 = vrot.lane.b32.xlu0 %v2320, 15
        %v2368 = vpop.permute.xlu0 %2367
        %v2385 = vsel %vm2269, %v2304, %v2338
        %v2386 = vsel %vm2270, %v2304, %v2340
        %v2387 = vsel %vm2271, %v2304, %v2342
        %v2388 = vsel %vm2272, %v2304, %v2344
        %v2389 = vsel %vm2273, %v2304, %v2346
        %v2390 = vsel %vm2274, %v2304, %v2348
        %v2391 = vsel %vm2275, %v2304, %v2350
        %v2392 = vsel %vm2276, %v2304, %v2352
        %v2393 = vsel %vm2277, %v2304, %v2354
        %v2394 = vsel %vm2278, %v2304, %v2356
        %v2395 = vsel %vm2279, %v2304, %v2358
        %v2396 = vsel %vm2280, %v2304, %v2360
        %v2397 = vsel %vm2281, %v2304, %v2362
        %v2398 = vsel %vm2282, %v2304, %v2364
        %v2399 = vsel %vm2283, %v2304, %v2366
        %v2400 = vsel %vm2284, %v2304, %v2368
        %vm2401 = vcmp.lt.f32.partialorder %v2385, 0.0
        %vm2402 = vcmp.lt.f32.partialorder %v2386, 0.0
        %vm2403 = vcmp.lt.f32.partialorder %v2387, 0.0
        %vm2404 = vcmp.lt.f32.partialorder %v2388, 0.0
        %vm2405 = vcmp.lt.f32.partialorder %v2389, 0.0
        %vm2406 = vcmp.lt.f32.partialorder %v2390, 0.0
        %vm2407 = vcmp.lt.f32.partialorder %v2391, 0.0
        %vm2408 = vcmp.lt.f32.partialorder %v2392, 0.0
        %vm2409 = vcmp.lt.f32.partialorder %v2393, 0.0
        %vm2410 = vcmp.lt.f32.partialorder %v2394, 0.0
        %vm2411 = vcmp.lt.f32.partialorder %v2395, 0.0
        %vm2412 = vcmp.lt.f32.partialorder %v2396, 0.0
        %vm2413 = vcmp.lt.f32.partialorder %v2397, 0.0
        %vm2414 = vcmp.lt.f32.partialorder %v2398, 0.0
        %vm2415 = vcmp.lt.f32.partialorder %v2399, 0.0
        %vm2416 = vcmp.lt.f32.partialorder %v2400, 0.0
        %v2417 = vsel %vm2401, 0.00990099, %v2385
        %v2418 = vsel %vm2402, 0.00990099, %v2386
        %v2419 = vsel %vm2403, 0.00990099, %v2387
        %v2420 = vsel %vm2404, 0.00990099, %v2388
        %v2421 = vsel %vm2405, 0.00990099, %v2389
        %v2422 = vsel %vm2406, 0.00990099, %v2390
        %v2423 = vsel %vm2407, 0.00990099, %v2391
        %v2424 = vsel %vm2408, 0.00990099, %v2392
        %v2425 = vsel %vm2409, 0.00990099, %v2393
        %v2426 = vsel %vm2410, 0.00990099, %v2394
        %v2427 = vsel %vm2411, 0.00990099, %v2395
        %v2428 = vsel %vm2412, 0.00990099, %v2396
        %v2429 = vsel %vm2413, 0.00990099, %v2397
        %v2430 = vsel %vm2414, 0.00990099, %v2398
        %v2431 = vsel %vm2415, 0.00990099, %v2399
        %v2432 = vsel %vm2416, 0.00990099, %v2400
        %vm2433 = vcmp.gt.f32.partialorder %v2417, 1.0
        %vm2434 = vcmp.gt.f32.partialorder %v2418, 1.0
        %vm2435 = vcmp.gt.f32.partialorder %v2419, 1.0
        %vm2436 = vcmp.gt.f32.partialorder %v2420, 1.0
        %vm2437 = vcmp.gt.f32.partialorder %v2421, 1.0
        %vm2438 = vcmp.gt.f32.partialorder %v2422, 1.0
        %vm2439 = vcmp.gt.f32.partialorder %v2423, 1.0
        %vm2440 = vcmp.gt.f32.partialorder %v2424, 1.0
        %vm2441 = vcmp.gt.f32.partialorder %v2425, 1.0
        %vm2442 = vcmp.gt.f32.partialorder %v2426, 1.0
        %vm2443 = vcmp.gt.f32.partialorder %v2427, 1.0
        %vm2444 = vcmp.gt.f32.partialorder %v2428, 1.0
        %vm2445 = vcmp.gt.f32.partialorder %v2429, 1.0
        %vm2446 = vcmp.gt.f32.partialorder %v2430, 1.0
        %vm2447 = vcmp.gt.f32.partialorder %v2431, 1.0
        %vm2448 = vcmp.gt.f32.partialorder %v2432, 1.0
        %v2449 = vsel %vm2433, 1.0, %v2417
        %v2450 = vsel %vm2434, 1.0, %v2418
        %v2451 = vsel %vm2435, 1.0, %v2419
        %v2452 = vsel %vm2436, 1.0, %v2420
        %v2453 = vsel %vm2437, 1.0, %v2421
        %v2454 = vsel %vm2438, 1.0, %v2422
        %v2455 = vsel %vm2439, 1.0, %v2423
        %v2456 = vsel %vm2440, 1.0, %v2424
        %v2457 = vsel %vm2441, 1.0, %v2425
        %v2458 = vsel %vm2442, 1.0, %v2426
        %v2459 = vsel %vm2443, 1.0, %v2427
        %v2460 = vsel %vm2444, 1.0, %v2428
        %v2461 = vsel %vm2445, 1.0, %v2429
        %v2462 = vsel %vm2446, 1.0, %v2430
        %v2463 = vsel %vm2447, 1.0, %v2431
        %v2464 = vsel %vm2448, 1.0, %v2432
        %vm2465 = vcmp.eq.f32.partialorder %v2449, 1.0
        %vm2466 = vcmp.eq.f32.partialorder %v2450, 1.0
        %vm2467 = vcmp.eq.f32.partialorder %v2451, 1.0
        %vm2468 = vcmp.eq.f32.partialorder %v2452, 1.0
        %vm2469 = vcmp.eq.f32.partialorder %v2453, 1.0
        %vm2470 = vcmp.eq.f32.partialorder %v2454, 1.0
        %vm2471 = vcmp.eq.f32.partialorder %v2455, 1.0
        %vm2472 = vcmp.eq.f32.partialorder %v2456, 1.0
        %vm2473 = vcmp.eq.f32.partialorder %v2457, 1.0
        %vm2474 = vcmp.eq.f32.partialorder %v2458, 1.0
        %vm2475 = vcmp.eq.f32.partialorder %v2459, 1.0
        %vm2476 = vcmp.eq.f32.partialorder %v2460, 1.0
        %vm2477 = vcmp.eq.f32.partialorder %v2461, 1.0
        %vm2478 = vcmp.eq.f32.partialorder %v2462, 1.0
        %vm2479 = vcmp.eq.f32.partialorder %v2463, 1.0
        %vm2480 = vcmp.eq.f32.partialorder %v2464, 1.0
        %v2481 = vsel %vm2465, 0.99, %v2449
        %v2482 = vsel %vm2466, 0.99, %v2450
        %v2483 = vsel %vm2467, 0.99, %v2451
        %v2484 = vsel %vm2468, 0.99, %v2452
        %v2485 = vsel %vm2469, 0.99, %v2453
        %v2486 = vsel %vm2470, 0.99, %v2454
        %v2487 = vsel %vm2471, 0.99, %v2455
        %v2488 = vsel %vm2472, 0.99, %v2456
        %v2489 = vsel %vm2473, 0.99, %v2457
        %v2490 = vsel %vm2474, 0.99, %v2458
        %v2491 = vsel %vm2475, 0.99, %v2459
        %v2492 = vsel %vm2476, 0.99, %v2460
        %v2493 = vsel %vm2477, 0.99, %v2461
        %v2494 = vsel %vm2478, 0.99, %v2462
        %v2495 = vsel %vm2479, 0.99, %v2463
        %v2496 = vsel %vm2480, 0.99, %v2464
        %v2497 = vsub.f32 1.0, %v2481
        %v2498 = vsub.f32 1.0, %v2482
        %v2499 = vsub.f32 1.0, %v2483
        %v2500 = vsub.f32 1.0, %v2484
        %v2501 = vsub.f32 1.0, %v2485
        %v2502 = vsub.f32 1.0, %v2486
        %v2503 = vsub.f32 1.0, %v2487
        %v2504 = vsub.f32 1.0, %v2488
        %v2505 = vsub.f32 1.0, %v2489
        %v2506 = vsub.f32 1.0, %v2490
        %v2507 = vsub.f32 1.0, %v2491
        %v2508 = vsub.f32 1.0, %v2492
        %v2509 = vsub.f32 1.0, %v2493
        %v2510 = vsub.f32 1.0, %v2494
        %v2511 = vsub.f32 1.0, %v2495
        %v2512 = vsub.f32 1.0, %v2496
        %v2513 = vrcp.pop 100.0
        %v2514 = vmul.f32 %v2497, %v2513
        %v2515 = vmul.f32 %v2498, %v2513
        %v2516 = vmul.f32 %v2499, %v2513
        %v2517 = vmul.f32 %v2500, %v2513
        %v2518 = vmul.f32 %v2501, %v2513
        %v2519 = vmul.f32 %v2502, %v2513
        %v2520 = vmul.f32 %v2503, %v2513
        %v2521 = vmul.f32 %v2504, %v2513
        %v2522 = vmul.f32 %v2505, %v2513
        %v2523 = vmul.f32 %v2506, %v2513
        %v2524 = vmul.f32 %v2507, %v2513
        %v2525 = vmul.f32 %v2508, %v2513
        %v2526 = vmul.f32 %v2509, %v2513
        %v2527 = vmul.f32 %v2510, %v2513
        %v2528 = vmul.f32 %v2511, %v2513
        %v2529 = vmul.f32 %v2512, %v2513
        %vm2530 = vcmp.eq.s32.totalorder %v1438, %v1484
        %vm2531 = vcmp.eq.s32.totalorder %v1438, %v1498
        %vm2532 = vcmp.eq.s32.totalorder %v1438, %v1512
        %vm2533 = vcmp.eq.s32.totalorder %v1438, %v1526
        %vm2534 = vcmp.eq.s32.totalorder %v1438, %v1540
        %vm2535 = vcmp.eq.s32.totalorder %v1438, %v1554
        %vm2536 = vcmp.eq.s32.totalorder %v1438, %v1568
        %vm2537 = vcmp.eq.s32.totalorder %v1438, %v1582
        %vm2538 = vcmp.eq.s32.totalorder %v1438, %v1596
        %vm2539 = vcmp.eq.s32.totalorder %v1438, %v1610
        %vm2540 = vcmp.eq.s32.totalorder %v1438, %v1624
        %vm2541 = vcmp.eq.s32.totalorder %v1438, %v1638
        %vm2542 = vcmp.eq.s32.totalorder %v1438, %v1652
        %vm2543 = vcmp.eq.s32.totalorder %v1438, %v1666
        %vm2544 = vcmp.eq.s32.totalorder %v1438, %v1680
        %vm2545 = vcmp.eq.s32.totalorder %v1438, %v1694
        %v2546 = vlog2.pop %v2481
        %v2547 = vmul.f32 %v2546, 0.6931472
        %v2548 = vlog2.pop %v2482
        %v2549 = vmul.f32 %v2548, 0.6931472
        %v2550 = vlog2.pop %v2483
        %v2551 = vmul.f32 %v2550, 0.6931472
        %v2552 = vlog2.pop %v2484
        %v2553 = vmul.f32 %v2552, 0.6931472
        %v2554 = vlog2.pop %v2485
        %v2555 = vmul.f32 %v2554, 0.6931472
        %v2556 = vlog2.pop %v2486
        %v2557 = vmul.f32 %v2556, 0.6931472
        %v2558 = vlog2.pop %v2487
        %v2559 = vmul.f32 %v2558, 0.6931472
        %v2560 = vlog2.pop %v2488
        %v2561 = vmul.f32 %v2560, 0.6931472
        %v2562 = vlog2.pop %v2489
        %v2563 = vmul.f32 %v2562, 0.6931472
        %v2564 = vlog2.pop %v2490
        %v2565 = vmul.f32 %v2564, 0.6931472
        %v2566 = vlog2.pop %v2491
        %v2567 = vmul.f32 %v2566, 0.6931472
        %v2568 = vlog2.pop %v2492
        %v2569 = vmul.f32 %v2568, 0.6931472
        %v2570 = vlog2.pop %v2493
        %v2571 = vmul.f32 %v2570, 0.6931472
        %v2572 = vlog2.pop %v2494
        %v2573 = vmul.f32 %v2572, 0.6931472
        %v2574 = vlog2.pop %v2495
        %v2575 = vmul.f32 %v2574, 0.6931472
        %v2576 = vlog2.pop %v2496
        %v2577 = vmul.f32 %v2576, 0.6931472
        %v2578 = vadd.f32 %v2547, 1.0
        %v2579 = vadd.f32 %v2549, 1.0
        %v2580 = vadd.f32 %v2551, 1.0
        %v2581 = vadd.f32 %v2553, 1.0
        %v2582 = vadd.f32 %v2555, 1.0
        %v2583 = vadd.f32 %v2557, 1.0
        %v2584 = vadd.f32 %v2559, 1.0
        %v2585 = vadd.f32 %v2561, 1.0
        %v2586 = vadd.f32 %v2563, 1.0
        %v2587 = vadd.f32 %v2565, 1.0
        %v2588 = vadd.f32 %v2567, 1.0
        %v2589 = vadd.f32 %v2569, 1.0
        %v2590 = vadd.f32 %v2571, 1.0
        %v2591 = vadd.f32 %v2573, 1.0
        %v2592 = vadd.f32 %v2575, 1.0
        %v2593 = vadd.f32 %v2577, 1.0
        %v2594 = vlog2.pop %v2514
        %v2595 = vmul.f32 %v2594, 0.6931472
        %v2596 = vlog2.pop %v2515
        %v2597 = vmul.f32 %v2596, 0.6931472
        %v2598 = vlog2.pop %v2516
        %v2599 = vmul.f32 %v2598, 0.6931472
        %v2600 = vlog2.pop %v2517
        %v2601 = vmul.f32 %v2600, 0.6931472
        %v2602 = vlog2.pop %v2518
        %v2603 = vmul.f32 %v2602, 0.6931472
        %v2604 = vlog2.pop %v2519
        %v2605 = vmul.f32 %v2604, 0.6931472
        %v2606 = vlog2.pop %v2520
        %v2607 = vmul.f32 %v2606, 0.6931472
        %v2608 = vlog2.pop %v2521
        %v2609 = vmul.f32 %v2608, 0.6931472
        %v2610 = vlog2.pop %v2522
        %v2611 = vmul.f32 %v2610, 0.6931472
        %v2612 = vlog2.pop %v2523
        %v2613 = vmul.f32 %v2612, 0.6931472
        %v2614 = vlog2.pop %v2524
        %v2615 = vmul.f32 %v2614, 0.6931472
        %v2616 = vlog2.pop %v2525
        %v2617 = vmul.f32 %v2616, 0.6931472
        %v2618 = vlog2.pop %v2526
        %v2619 = vmul.f32 %v2618, 0.6931472
        %v2620 = vlog2.pop %v2527
        %v2621 = vmul.f32 %v2620, 0.6931472
        %v2622 = vlog2.pop %v2528
        %v2623 = vmul.f32 %v2622, 0.6931472
        %v2624 = vlog2.pop %v2529
        %v2625 = vmul.f32 %v2624, 0.6931472
        %v2626 = vadd.f32 %v2595, 1.0
        %v2627 = vadd.f32 %v2597, 1.0
        %v2628 = vadd.f32 %v2599, 1.0
        %v2629 = vadd.f32 %v2601, 1.0
        %v2630 = vadd.f32 %v2603, 1.0
        %v2631 = vadd.f32 %v2605, 1.0
        %v2632 = vadd.f32 %v2607, 1.0
        %v2633 = vadd.f32 %v2609, 1.0
        %v2634 = vadd.f32 %v2611, 1.0
        %v2635 = vadd.f32 %v2613, 1.0
        %v2636 = vadd.f32 %v2615, 1.0
        %v2637 = vadd.f32 %v2617, 1.0
        %v2638 = vadd.f32 %v2619, 1.0
        %v2639 = vadd.f32 %v2621, 1.0
        %v2640 = vadd.f32 %v2623, 1.0
        %v2641 = vadd.f32 %v2625, 1.0
        %2643 = vset.pattern.permute.xlu0 15
        %2644 = vperm.xlu0 %2643, %v2578
        %v2645 = vpop.permute.xlu0 %2644
        %2648 = vset.pattern.permute.xlu0 15
        %2649 = vperm.xlu0 %2648, %v2579
        %v2650 = vpop.permute.xlu0 %2649
        %2653 = vset.pattern.permute.xlu0 15
        %2654 = vperm.xlu0 %2653, %v2580
        %v2655 = vpop.permute.xlu0 %2654
        %2658 = vset.pattern.permute.xlu0 15
        %2659 = vperm.xlu0 %2658, %v2581
        %v2660 = vpop.permute.xlu0 %2659
        %2663 = vset.pattern.permute.xlu0 15
        %2664 = vperm.xlu0 %2663, %v2582
        %v2665 = vpop.permute.xlu0 %2664
        %2668 = vset.pattern.permute.xlu0 15
        %2669 = vperm.xlu0 %2668, %v2583
        %v2670 = vpop.permute.xlu0 %2669
        %2673 = vset.pattern.permute.xlu0 15
        %2674 = vperm.xlu0 %2673, %v2584
        %v2675 = vpop.permute.xlu0 %2674
        %2678 = vset.pattern.permute.xlu0 15
        %2679 = vperm.xlu0 %2678, %v2585
        %v2680 = vpop.permute.xlu0 %2679
        %2683 = vset.pattern.permute.xlu0 15
        %2684 = vperm.xlu0 %2683, %v2586
        %v2685 = vpop.permute.xlu0 %2684
        %2688 = vset.pattern.permute.xlu0 15
        %2689 = vperm.xlu0 %2688, %v2587
        %v2690 = vpop.permute.xlu0 %2689
        %2693 = vset.pattern.permute.xlu0 15
        %2694 = vperm.xlu0 %2693, %v2588
        %v2695 = vpop.permute.xlu0 %2694
        %2698 = vset.pattern.permute.xlu0 15
        %2699 = vperm.xlu0 %2698, %v2589
        %v2700 = vpop.permute.xlu0 %2699
        %2703 = vset.pattern.permute.xlu0 15
        %2704 = vperm.xlu0 %2703, %v2590
        %v2705 = vpop.permute.xlu0 %2704
        %2708 = vset.pattern.permute.xlu0 15
        %2709 = vperm.xlu0 %2708, %v2591
        %v2710 = vpop.permute.xlu0 %2709
        %2713 = vset.pattern.permute.xlu0 15
        %2714 = vperm.xlu0 %2713, %v2592
        %v2715 = vpop.permute.xlu0 %2714
        %2718 = vset.pattern.permute.xlu0 15
        %2719 = vperm.xlu0 %2718, %v2593
        %v2720 = vpop.permute.xlu0 %2719
        %2723 = vset.pattern.permute.xlu0 15
        %2724 = vperm.xlu0 %2723, %v2626
        %v2725 = vpop.permute.xlu0 %2724
        %2728 = vset.pattern.permute.xlu0 15
        %2729 = vperm.xlu0 %2728, %v2627
        %v2730 = vpop.permute.xlu0 %2729
        %2733 = vset.pattern.permute.xlu0 15
        %2734 = vperm.xlu0 %2733, %v2628
        %v2735 = vpop.permute.xlu0 %2734
        %2738 = vset.pattern.permute.xlu0 15
        %2739 = vperm.xlu0 %2738, %v2629
        %v2740 = vpop.permute.xlu0 %2739
        %2743 = vset.pattern.permute.xlu0 15
        %2744 = vperm.xlu0 %2743, %v2630
        %v2745 = vpop.permute.xlu0 %2744
        %2748 = vset.pattern.permute.xlu0 15
        %2749 = vperm.xlu0 %2748, %v2631
        %v2750 = vpop.permute.xlu0 %2749
        %2753 = vset.pattern.permute.xlu0 15
        %2754 = vperm.xlu0 %2753, %v2632
        %v2755 = vpop.permute.xlu0 %2754
        %2758 = vset.pattern.permute.xlu0 15
        %2759 = vperm.xlu0 %2758, %v2633
        %v2760 = vpop.permute.xlu0 %2759
        %2763 = vset.pattern.permute.xlu0 15
        %2764 = vperm.xlu0 %2763, %v2634
        %v2765 = vpop.permute.xlu0 %2764
        %2768 = vset.pattern.permute.xlu0 15
        %2769 = vperm.xlu0 %2768, %v2635
        %v2770 = vpop.permute.xlu0 %2769
        %2773 = vset.pattern.permute.xlu0 15
        %2774 = vperm.xlu0 %2773, %v2636
        %v2775 = vpop.permute.xlu0 %2774
        %2778 = vset.pattern.permute.xlu0 15
        %2779 = vperm.xlu0 %2778, %v2637
        %v2780 = vpop.permute.xlu0 %2779
        %2783 = vset.pattern.permute.xlu0 15
        %2784 = vperm.xlu0 %2783, %v2638
        %v2785 = vpop.permute.xlu0 %2784
        %2788 = vset.pattern.permute.xlu0 15
        %2789 = vperm.xlu0 %2788, %v2639
        %v2790 = vpop.permute.xlu0 %2789
        %2793 = vset.pattern.permute.xlu0 15
        %2794 = vperm.xlu0 %2793, %v2640
        %v2795 = vpop.permute.xlu0 %2794
        %2798 = vset.pattern.permute.xlu0 15
        %2799 = vperm.xlu0 %2798, %v2641
        %v2800 = vpop.permute.xlu0 %2799
        %v2802 = vsel %vm2530, %v2645, %v2725
        %v2803 = vsel %vm2531, %v2650, %v2730
        %v2804 = vsel %vm2532, %v2655, %v2735
        %v2805 = vsel %vm2533, %v2660, %v2740
        %v2806 = vsel %vm2534, %v2665, %v2745
        %v2807 = vsel %vm2535, %v2670, %v2750
        %v2808 = vsel %vm2536, %v2675, %v2755
        %v2809 = vsel %vm2537, %v2680, %v2760
        %v2810 = vsel %vm2538, %v2685, %v2765
        %v2811 = vsel %vm2539, %v2690, %v2770
        %v2812 = vsel %vm2540, %v2695, %v2775
        %v2813 = vsel %vm2541, %v2700, %v2780
        %v2814 = vsel %vm2542, %v2705, %v2785
        %v2815 = vsel %vm2543, %v2710, %v2790
        %v2816 = vsel %vm2544, %v2715, %v2795
        %v2817 = vsel %vm2545, %v2720, %v2800
        %2818 = vst [vmem:[%s191] sm:$0xff] %v2802
        %2819 = vst [vmem:[%s191 + $0x8] sm:$0xff] %v2803
        %2820 = vst [vmem:[%s191 + $0x10] sm:$0xff] %v2804
        %2821 = vst [vmem:[%s191 + $0x18] sm:$0xff] %v2805
        %2822 = vst [vmem:[%s191 + $0x20] sm:$0xff] %v2806
        %2823 = vst [vmem:[%s191 + $0x28] sm:$0xff] %v2807
        %2824 = vst [vmem:[%s191 + $0x30] sm:$0xff] %v2808
        %2825 = vst [vmem:[%s191 + $0x38] sm:$0xff] %v2809
        %2826 = vst [vmem:[%s191 + $0x40] sm:$0xff] %v2810
        %2827 = vst [vmem:[%s191 + $0x48] sm:$0xff] %v2811
        %2828 = vst [vmem:[%s191 + $0x50] sm:$0xff] %v2812
        %2829 = vst [vmem:[%s191 + $0x58] sm:$0xff] %v2813
        %2830 = vst [vmem:[%s191 + $0x60] sm:$0xff] %v2814
        %2831 = vst [vmem:[%s191 + $0x68] sm:$0xff] %v2815
        %2832 = vst [vmem:[%s191 + $0x70] sm:$0xff] %v2816
        %2833 = vst [vmem:[%s191 + $0x78] sm:$0xff] %v2817
        %s2834 = sand.u32 %s115, 1
        %s2835 = scalar_lea.sflag [#allocation3], %s2834
        %s2836 = sand.u32 %s115, 1
        %s2837 = smul.addr %s2836, 128
        %s2838 = scalar_lea.vmem [#allocation2], %s2837
        // Predicated region
        $region37: #{tpu_custom_call.1} parent=35 // pred_check
          %p2839 = pneg %p125
        $region38: #{tpu_custom_call.1} parent=35 // pred_check_branch
          %2841 = sbr.rel (%p2839) target = $region40
        $region39: #{tpu_custom_call.1} parent=35 // pred_region
          %s2842 = smul.u32 16, %s18
          %s2844 = ssub.s32 2048, 2048
          %2845 = vsyncadd %s2835, %s2844
          %s2846 = smul.addr %s2842, 128
          %s2847 = scalar_lea.hbm %s4, %s2846
          %s2848 = sshll.u32 %s2838, 4
          %s2849 = int_to_ptr.vmem [resolvable:$true] %s2848
          %2854 = dma.vmem_to_hbm [thread:$0]  %s2849, 2048, %s2847, %s2835, 128, 128, 8
        $region40: #{tpu_custom_call.1} parent=35 // pred_fallthru
          _
      $region36: #{tpu_custom_call.1} parent=5 // pred_fallthru
        _
      %p2855 = scmp.le.s32.totalorder 2, %s13
      // Predicated region
      $region41: #{tpu_custom_call.1} parent=5 // pred_check
        %p2856 = pneg %p2855
      $region42: #{tpu_custom_call.1} parent=5 // pred_check_branch
        %2858 = sbr.rel (%p2856) target = $region44
      $region43: #{tpu_custom_call.1} parent=5 // pred_region
        %s2859 = ssub.s32 %s13, 2
        // Predicated region
        $region45: #{tpu_custom_call.1} parent=43 // pred_check
          %p2860 = pneg %p131
        $region46: #{tpu_custom_call.1} parent=43 // pred_check_branch
          %2862 = sbr.rel (%p2860) target = $region48
        $region47: #{tpu_custom_call.1} parent=43 // pred_region
          %s2863 = sand.u32 %s116, 1
          %s2864 = scalar_lea.sflag [#allocation3], %s2863
          %s2865 = sand.u32 %s116, 1
          %s2866 = smul.addr %s2865, 128
          %s2867 = scalar_lea.vmem [#allocation2], %s2866
          %2868 = dma.done %s2864, 2048
        $region48: #{tpu_custom_call.1} parent=43 // pred_fallthru
          _
      $region44: #{tpu_custom_call.1} parent=5 // pred_fallthru
        _
    $region6: #{tpu_custom_call.1} parent=1 // loop_footer
      %s17 = sadd.s32 1, %s13
    $region7: #{tpu_custom_call.1} parent=1 // loop_footer_branch
      %12 = sbr.rel target = $region3
    $region8: #{tpu_custom_call.1} parent=1 // loop_exit
      _
    %2869 = vsyncpa [#allocation3], 1
    %s2870 = scalar_lea.sflag [#allocation3], 1
    %2871 = vsyncpa %s2870, 1

</llo_original>
